<compile_context>
chip_gen: v7x
topology: tpu7x:2x2x1
jax: 0.10.0
libtpu: 0.0.40
codegen_flags: <defaults>
</compile_context>

<pallas_src>
import functools

import jax
import jax.numpy as jnp
from jax.experimental import pallas as pl
from jax.experimental.pallas import tpu as pltpu


_LOSS_LANES = 128  # lane-dense partial-loss block


def _round_up(x, m):
    return ((x + m - 1) // m) * m


def ae_kernel(x_ref,
              w1_ref, b1_ref,   # Linear(input_dim -> h_dim)
              w2_ref, b2_ref,   # Linear(h_dim -> h_dim)
              w3_ref, b3_ref,   # Linear(h_dim -> z_dim)
              w4_ref, b4_ref,   # Linear(z_dim -> h_dim)
              w5_ref, b5_ref,   # Linear(h_dim -> input_dim)
              loss_ref, z_ref,
              *, batch, tm):
    cdt = x_ref.dtype
    x = x_ref[...]

    # ---------------- encoder ----------------
    h = jnp.dot(x, w1_ref[...], preferred_element_type=jnp.float32) + b1_ref[...]
    h = jnp.maximum(h, 0.0).astype(cdt)                                  # ReLU
    h = jnp.dot(h, w2_ref[...], preferred_element_type=jnp.float32) + b2_ref[...]
    h = jnp.maximum(h, 0.0).astype(cdt)                                  # ReLU
    z = jnp.tanh(jnp.dot(h, w3_ref[...], preferred_element_type=jnp.float32)
                 + b3_ref[...])                                          # Tanh (f32)
    z_ref[...] = z.astype(z_ref.dtype)

    # ---------------- decoder ----------------
    d = jnp.dot(z.astype(cdt), w4_ref[...],
                preferred_element_type=jnp.float32) + b4_ref[...]
    d = jnp.where(d > 0.0, d, 0.01 * d).astype(cdt)                      # LeakyReLU(0.01)
    recon = jnp.dot(d, w5_ref[...], preferred_element_type=jnp.float32) + b5_ref[...]
    recon = jnp.maximum(recon, 0.0)                                      # ReLU (f32)

    # ---- per-tile partial sum of squared error (mask rows past true batch) ----
    i = pl.program_id(0)
    row_ids = i * tm + jax.lax.broadcasted_iota(jnp.int32, (tm, 1), 0)
    diff = jnp.where(row_ids < batch, x.astype(jnp.float32) - recon, 0.0)
    partial = jnp.sum(diff * diff)
    loss_ref[...] = jnp.full((1, 1, _LOSS_LANES), partial, dtype=jnp.float32)


def init_params(key, input_dim, h_dim, z_dim):
    """Deterministic synthetic nn.Linear-style params, stored (in, out); bias (1, out)."""
    dims = [(input_dim, h_dim), (h_dim, h_dim), (h_dim, z_dim),
            (z_dim, h_dim), (h_dim, input_dim)]
    params = []
    for i, (din, dout) in enumerate(dims):
        kw, kb = jax.random.split(jax.random.fold_in(key, i))
        scale = 1.0 / jnp.sqrt(jnp.float32(din))
        params.append(jax.random.uniform(kw, (din, dout), jnp.float32, -scale, scale))
        params.append(jax.random.uniform(kb, (1, dout), jnp.float32, -scale, scale))
    return params


def ae_forward(x, params, *, tm=512, compute_dtype=jnp.float32):
    """Full AE forward in one batch-tiled Pallas kernel. Returns (mse_loss, z)."""
    batch, input_dim = x.shape
    h_dim = params[0].shape[1]
    z_dim = params[4].shape[1]

    # Batch tile: multiple of 8 sublanes, no larger than the rounded-up batch.
    tm = max(8, min(_round_up(tm, 8), _round_up(batch, 8)))
    padded_batch = _round_up(batch, tm)
    grid_m = padded_batch // tm

    xp = x.astype(compute_dtype)
    if padded_batch != batch:
        xp = jnp.pad(xp, ((0, padded_batch - batch), (0, 0)))
    cparams = [p.astype(compute_dtype) for p in params]

    # VMEM budget: double-buffered x/z/loss tiles + resident weights + activations,
    # clamped to also fit v7x's 64 MiB per-core VMEM.
    itemsize = jnp.dtype(compute_dtype).itemsize
    weight_bytes = sum(int(p.size) * itemsize for p in params)
    io_bytes = tm * input_dim * itemsize + tm * z_dim * 4 + _LOSS_LANES * 4
    act_bytes = tm * (2 * h_dim + z_dim + 2 * input_dim) * 4
    vmem_limit = int(min(max(4 * io_bytes + 2 * weight_bytes + 4 * act_bytes,
                             16 * 1024 * 1024),
                         48 * 1024 * 1024))

    kernel = functools.partial(ae_kernel, batch=batch, tm=tm)
    # Weights/biases: constant index_map -> DMA'd once, resident across grid steps.
    weight_specs = [pl.BlockSpec(p.shape, lambda i: (0, 0)) for p in params]

    grid_spec = pltpu.PrefetchScalarGridSpec(
        num_scalar_prefetch=0,
        grid=(grid_m,),
        in_specs=[pl.BlockSpec((tm, input_dim), lambda i: (i, 0))] + weight_specs,
        out_specs=(
            pl.BlockSpec((1, 1, _LOSS_LANES), lambda i: (i, 0, 0)),
            pl.BlockSpec((tm, z_dim), lambda i: (i, 0)),
        ),
    )

    partial_loss, z_pad = pl.pallas_call(
        kernel,
        out_shape=(
            jax.ShapeDtypeStruct((grid_m, 1, _LOSS_LANES), jnp.float32),
            jax.ShapeDtypeStruct((padded_batch, z_dim), jnp.float32),
        ),
        grid_spec=grid_spec,
        compiler_params=pltpu.CompilerParams(
            dimension_semantics=("parallel",),   # no cross-tile dependency
            vmem_limit_bytes=vmem_limit,
        ),
    )(xp, *cparams)

    loss = jnp.sum(partial_loss[:, 0, 0]) * jnp.float32(1.0 / (batch * input_dim))
    return loss, z_pad[:batch]


def ae_reference(x, params):
    """Pure-JAX reference mirroring the PyTorch forward."""
    w1, b1, w2, b2, w3, b3, w4, b4, w5, b5 = params
    h = jnp.maximum(x @ w1 + b1, 0.0)
    h = jnp.maximum(h @ w2 + b2, 0.0)
    z = jnp.tanh(h @ w3 + b3)
    d = z @ w4 + b4
    d = jnp.where(d > 0.0, d, 0.01 * d)
    recon = jnp.maximum(d @ w5 + b5, 0.0)
    return jnp.mean((x - recon) ** 2), z


if __name__ == "__main__":
    input_dim, h_dim, z_dim = 64, 32, 16
    batch = 200  # deliberately NOT a multiple of the tile -> exercises row masking

    key = jax.random.PRNGKey(0)
    kx, kp = jax.random.split(key)
    x = jax.random.normal(kx, (batch, input_dim), jnp.float32)
    params = init_params(kp, input_dim, h_dim, z_dim)

    # tm=64 gives a 4-step pipelined grid at this small demo batch; real
    # workloads use the default tm=512 (still well inside the VMEM budget).
    loss, z = ae_forward(x, params, tm=64)
    jax.block_until_ready((loss, z))

    loss_ref, z_ref = ae_reference(x, params)
    assert z.shape == (batch, z_dim)
    assert jnp.allclose(z, z_ref, rtol=1e-5, atol=1e-5), \
        float(jnp.max(jnp.abs(z - z_ref)))
    assert jnp.allclose(loss, loss_ref, rtol=1e-4, atol=1e-6), \
        (float(loss), float(loss_ref))

    print("KERNEL_OK")
</pallas_src>

<mosaic_0001>
module attributes {stable_mosaic.version = 11 : i64} {
  func.func @ae_kernel(%arg0: i32, %arg1: memref<64x64xf32, #tpu.memory_space<vmem>>, %arg2: memref<64x32xf32, #tpu.memory_space<vmem>>, %arg3: memref<1x32xf32, #tpu.memory_space<vmem>>, %arg4: memref<32x32xf32, #tpu.memory_space<vmem>>, %arg5: memref<1x32xf32, #tpu.memory_space<vmem>>, %arg6: memref<32x16xf32, #tpu.memory_space<vmem>>, %arg7: memref<1x16xf32, #tpu.memory_space<vmem>>, %arg8: memref<16x32xf32, #tpu.memory_space<vmem>>, %arg9: memref<1x32xf32, #tpu.memory_space<vmem>>, %arg10: memref<32x64xf32, #tpu.memory_space<vmem>>, %arg11: memref<1x64xf32, #tpu.memory_space<vmem>>, %arg12: memref<1x1x128xf32, #tpu.memory_space<vmem>>, %arg13: memref<64x16xf32, #tpu.memory_space<vmem>>) attributes {dimension_semantics = [#tpu.dimension_semantics<parallel>], iteration_bounds = array<i64: 4>, scalar_prefetch = 0 : i64, scratch_operands = 0 : i64, tpu.core_type = #tpu.core_type<tc>, window_params = [{transform_indices = @transform_0, window_bounds = array<i64: 64, 64>}, {pipeline_mode = #tpu.pipeline_mode<synchronous>, transform_indices = @transform_1, window_bounds = array<i64: 64, 32>}, {pipeline_mode = #tpu.pipeline_mode<synchronous>, transform_indices = @transform_2, window_bounds = array<i64: 1, 32>}, {pipeline_mode = #tpu.pipeline_mode<synchronous>, transform_indices = @transform_3, window_bounds = array<i64: 32, 32>}, {pipeline_mode = #tpu.pipeline_mode<synchronous>, transform_indices = @transform_4, window_bounds = array<i64: 1, 32>}, {pipeline_mode = #tpu.pipeline_mode<synchronous>, transform_indices = @transform_5, window_bounds = array<i64: 32, 16>}, {pipeline_mode = #tpu.pipeline_mode<synchronous>, transform_indices = @transform_6, window_bounds = array<i64: 1, 16>}, {pipeline_mode = #tpu.pipeline_mode<synchronous>, transform_indices = @transform_7, window_bounds = array<i64: 16, 32>}, {pipeline_mode = #tpu.pipeline_mode<synchronous>, transform_indices = @transform_8, window_bounds = array<i64: 1, 32>}, {pipeline_mode = #tpu.pipeline_mode<synchronous>, transform_indices = @transform_9, window_bounds = array<i64: 32, 64>}, {pipeline_mode = #tpu.pipeline_mode<synchronous>, transform_indices = @transform_10, window_bounds = array<i64: 1, 64>}, {transform_indices = @transform_11, window_bounds = array<i64: 1, 1, 128>}, {transform_indices = @transform_12, window_bounds = array<i64: 64, 16>}]} {
    %c0 = arith.constant 0 : index
    %c0_0 = arith.constant 0 : index
    %0 = vector.load %arg1[%c0, %c0_0] : memref<64x64xf32, #tpu.memory_space<vmem>>, vector<64x64xf32>
    %c0_1 = arith.constant 0 : index
    %c0_2 = arith.constant 0 : index
    %1 = vector.load %arg2[%c0_1, %c0_2] : memref<64x32xf32, #tpu.memory_space<vmem>>, vector<64x32xf32>
    %cst = arith.constant dense<0.000000e+00> : vector<64x32xf32>
    %2 = tpu.matmul %0, %1, %cst {dimension_numbers = #tpu.dot_dimension_numbers<[1], [0], [0], [1], [0, 0, 1, 1], [], []>} : vector<64x64xf32>, vector<64x32xf32>, vector<64x32xf32> -> vector<64x32xf32>
    %c0_3 = arith.constant 0 : index
    %c0_4 = arith.constant 0 : index
    %3 = vector.load %arg3[%c0_3, %c0_4] : memref<1x32xf32, #tpu.memory_space<vmem>>, vector<1x32xf32>
    %4 = vector.broadcast %3 : vector<1x32xf32> to vector<64x32xf32>
    %5 = arith.addf %2, %4 : vector<64x32xf32>
    %cst_5 = arith.constant 0.000000e+00 : f32
    %6 = vector.broadcast %cst_5 : f32 to vector<64x32xf32>
    %7 = arith.maximumf %5, %6 : vector<64x32xf32>
    %c0_6 = arith.constant 0 : index
    %c0_7 = arith.constant 0 : index
    %8 = vector.load %arg4[%c0_6, %c0_7] : memref<32x32xf32, #tpu.memory_space<vmem>>, vector<32x32xf32>
    %cst_8 = arith.constant dense<0.000000e+00> : vector<64x32xf32>
    %9 = tpu.matmul %7, %8, %cst_8 {dimension_numbers = #tpu.dot_dimension_numbers<[1], [0], [0], [1], [0, 0, 1, 1], [], []>} : vector<64x32xf32>, vector<32x32xf32>, vector<64x32xf32> -> vector<64x32xf32>
    %c0_9 = arith.constant 0 : index
    %c0_10 = arith.constant 0 : index
    %10 = vector.load %arg5[%c0_9, %c0_10] : memref<1x32xf32, #tpu.memory_space<vmem>>, vector<1x32xf32>
    %11 = vector.broadcast %10 : vector<1x32xf32> to vector<64x32xf32>
    %12 = arith.addf %9, %11 : vector<64x32xf32>
    %cst_11 = arith.constant 0.000000e+00 : f32
    %13 = vector.broadcast %cst_11 : f32 to vector<64x32xf32>
    %14 = arith.maximumf %12, %13 : vector<64x32xf32>
    %c0_12 = arith.constant 0 : index
    %c0_13 = arith.constant 0 : index
    %15 = vector.load %arg6[%c0_12, %c0_13] : memref<32x16xf32, #tpu.memory_space<vmem>>, vector<32x16xf32>
    %cst_14 = arith.constant dense<0.000000e+00> : vector<64x16xf32>
    %16 = tpu.matmul %14, %15, %cst_14 {dimension_numbers = #tpu.dot_dimension_numbers<[1], [0], [0], [1], [0, 0, 1, 1], [], []>} : vector<64x32xf32>, vector<32x16xf32>, vector<64x16xf32> -> vector<64x16xf32>
    %c0_15 = arith.constant 0 : index
    %c0_16 = arith.constant 0 : index
    %17 = vector.load %arg7[%c0_15, %c0_16] : memref<1x16xf32, #tpu.memory_space<vmem>>, vector<1x16xf32>
    %18 = vector.broadcast %17 : vector<1x16xf32> to vector<64x16xf32>
    %19 = arith.addf %16, %18 : vector<64x16xf32>
    %20 = math.tanh %19 : vector<64x16xf32>
    %c0_17 = arith.constant 0 : index
    %c0_18 = arith.constant 0 : index
    %21 = vector.load %arg13[%c0_17, %c0_18] : memref<64x16xf32, #tpu.memory_space<vmem>>, vector<64x16xf32>
    tpu.vector_store %arg13[%c0_17, %c0_18], %20 {strides = array<i32>} : memref<64x16xf32, #tpu.memory_space<vmem>>, vector<64x16xf32>,
    %c0_19 = arith.constant 0 : index
    %c0_20 = arith.constant 0 : index
    %22 = vector.load %arg8[%c0_19, %c0_20] : memref<16x32xf32, #tpu.memory_space<vmem>>, vector<16x32xf32>
    %cst_21 = arith.constant dense<0.000000e+00> : vector<64x32xf32>
    %23 = tpu.matmul %20, %22, %cst_21 {dimension_numbers = #tpu.dot_dimension_numbers<[1], [0], [0], [1], [0, 0, 1, 1], [], []>} : vector<64x16xf32>, vector<16x32xf32>, vector<64x32xf32> -> vector<64x32xf32>
    %c0_22 = arith.constant 0 : index
    %c0_23 = arith.constant 0 : index
    %24 = vector.load %arg9[%c0_22, %c0_23] : memref<1x32xf32, #tpu.memory_space<vmem>>, vector<1x32xf32>
    %25 = vector.broadcast %24 : vector<1x32xf32> to vector<64x32xf32>
    %26 = arith.addf %23, %25 : vector<64x32xf32>
    %cst_24 = arith.constant 0.000000e+00 : f32
    %27 = vector.broadcast %cst_24 : f32 to vector<64x32xf32>
    %28 = arith.cmpf ogt, %26, %27 : vector<64x32xf32>
    %cst_25 = arith.constant 0.00999999977 : f32
    %29 = vector.broadcast %cst_25 : f32 to vector<64x32xf32>
    %30 = arith.mulf %29, %26 : vector<64x32xf32>
    %31 = arith.select %28, %26, %30 : vector<64x32xi1>, vector<64x32xf32>
    %c0_26 = arith.constant 0 : index
    %c0_27 = arith.constant 0 : index
    %32 = vector.load %arg10[%c0_26, %c0_27] : memref<32x64xf32, #tpu.memory_space<vmem>>, vector<32x64xf32>
    %cst_28 = arith.constant dense<0.000000e+00> : vector<64x64xf32>
    %33 = tpu.matmul %31, %32, %cst_28 {dimension_numbers = #tpu.dot_dimension_numbers<[1], [0], [0], [1], [0, 0, 1, 1], [], []>} : vector<64x32xf32>, vector<32x64xf32>, vector<64x64xf32> -> vector<64x64xf32>
    %c0_29 = arith.constant 0 : index
    %c0_30 = arith.constant 0 : index
    %34 = vector.load %arg11[%c0_29, %c0_30] : memref<1x64xf32, #tpu.memory_space<vmem>>, vector<1x64xf32>
    %35 = vector.broadcast %34 : vector<1x64xf32> to vector<64x64xf32>
    %36 = arith.addf %33, %35 : vector<64x64xf32>
    %cst_31 = arith.constant 0.000000e+00 : f32
    %37 = vector.broadcast %cst_31 : f32 to vector<64x64xf32>
    %38 = arith.maximumf %36, %37 : vector<64x64xf32>
    %c64_i32 = arith.constant 64 : i32
    %39 = arith.muli %arg0, %c64_i32 : i32
    %40 = tpu.iota {dimensions = array<i32: 0>} : vector<64x1xi32>
    %41 = vector.broadcast %39 : i32 to vector<64x1xi32>
    %42 = arith.addi %41, %40 : vector<64x1xi32>
    %c200_i32 = arith.constant 200 : i32
    %43 = vector.broadcast %c200_i32 : i32 to vector<64x1xi32>
    %44 = arith.cmpi slt, %42, %43 : vector<64x1xi32>
    %45 = arith.subf %0, %38 : vector<64x64xf32>
    %cst_32 = arith.constant 0.000000e+00 : f32
    %46 = vector.shape_cast %44 : vector<64x1xi1> to vector<64x1xi1>
    %47 = vector.broadcast %46 : vector<64x1xi1> to vector<64x64xi1>
    %48 = vector.broadcast %cst_32 : f32 to vector<64x64xf32>
    %49 = arith.select %47, %45, %48 : vector<64x64xi1>, vector<64x64xf32>
    %50 = arith.mulf %49, %49 : vector<64x64xf32>
    %51 = vector.shape_cast %50 : vector<64x64xf32> to vector<1x64x64xf32>
    %cst_33 = arith.constant dense<0.000000e+00> : vector<1xf32>
    %52 = vector.multi_reduction <add>, %51, %cst_33 [1, 2] : vector<1x64x64xf32> to vector<1xf32>
    %53 = vector.shape_cast %52 : vector<1xf32> to vector<1x1x1xf32>
    %54 = vector.extract %53[0, 0, 0] : f32 from vector<1x1x1xf32>
    %55 = vector.broadcast %54 : f32 to vector<1x1x128xf32>
    %c0_34 = arith.constant 0 : index
    %c0_35 = arith.constant 0 : index
    %c0_36 = arith.constant 0 : index
    %56 = vector.load %arg12[%c0_34, %c0_35, %c0_36] : memref<1x1x128xf32, #tpu.memory_space<vmem>>, vector<1x1x128xf32>
    tpu.vector_store %arg12[%c0_34, %c0_35, %c0_36], %55 {strides = array<i32>} : memref<1x1x128xf32, #tpu.memory_space<vmem>>, vector<1x1x128xf32>,
    return
  }
  func.func @transform_0(%arg0: i32) -> (i32, i32) {
    %c0_i32 = arith.constant 0 : i32
    %c0_i32_0 = arith.constant 0 : i32
    return %arg0, %c0_i32 : i32, i32
  }
  func.func @transform_1(%arg0: i32) -> (i32, i32) {
    %c0_i32 = arith.constant 0 : i32
    %c0_i32_0 = arith.constant 0 : i32
    %c0_i32_1 = arith.constant 0 : i32
    return %c0_i32, %c0_i32_0 : i32, i32
  }
  func.func @transform_2(%arg0: i32) -> (i32, i32) {
    %c0_i32 = arith.constant 0 : i32
    %c0_i32_0 = arith.constant 0 : i32
    %c0_i32_1 = arith.constant 0 : i32
    return %c0_i32, %c0_i32_0 : i32, i32
  }
  func.func @transform_3(%arg0: i32) -> (i32, i32) {
    %c0_i32 = arith.constant 0 : i32
    %c0_i32_0 = arith.constant 0 : i32
    %c0_i32_1 = arith.constant 0 : i32
    return %c0_i32, %c0_i32_0 : i32, i32
  }
  func.func @transform_4(%arg0: i32) -> (i32, i32) {
    %c0_i32 = arith.constant 0 : i32
    %c0_i32_0 = arith.constant 0 : i32
    %c0_i32_1 = arith.constant 0 : i32
    return %c0_i32, %c0_i32_0 : i32, i32
  }
  func.func @transform_5(%arg0: i32) -> (i32, i32) {
    %c0_i32 = arith.constant 0 : i32
    %c0_i32_0 = arith.constant 0 : i32
    %c0_i32_1 = arith.constant 0 : i32
    return %c0_i32, %c0_i32_0 : i32, i32
  }
  func.func @transform_6(%arg0: i32) -> (i32, i32) {
    %c0_i32 = arith.constant 0 : i32
    %c0_i32_0 = arith.constant 0 : i32
    %c0_i32_1 = arith.constant 0 : i32
    return %c0_i32, %c0_i32_0 : i32, i32
  }
  func.func @transform_7(%arg0: i32) -> (i32, i32) {
    %c0_i32 = arith.constant 0 : i32
    %c0_i32_0 = arith.constant 0 : i32
    %c0_i32_1 = arith.constant 0 : i32
    return %c0_i32, %c0_i32_0 : i32, i32
  }
  func.func @transform_8(%arg0: i32) -> (i32, i32) {
    %c0_i32 = arith.constant 0 : i32
    %c0_i32_0 = arith.constant 0 : i32
    %c0_i32_1 = arith.constant 0 : i32
    return %c0_i32, %c0_i32_0 : i32, i32
  }
  func.func @transform_9(%arg0: i32) -> (i32, i32) {
    %c0_i32 = arith.constant 0 : i32
    %c0_i32_0 = arith.constant 0 : i32
    %c0_i32_1 = arith.constant 0 : i32
    return %c0_i32, %c0_i32_0 : i32, i32
  }
  func.func @transform_10(%arg0: i32) -> (i32, i32) {
    %c0_i32 = arith.constant 0 : i32
    %c0_i32_0 = arith.constant 0 : i32
    %c0_i32_1 = arith.constant 0 : i32
    return %c0_i32, %c0_i32_0 : i32, i32
  }
  func.func @transform_11(%arg0: i32) -> (i32, i32, i32) {
    %c0_i32 = arith.constant 0 : i32
    %c0_i32_0 = arith.constant 0 : i32
    %c0_i32_1 = arith.constant 0 : i32
    return %arg0, %c0_i32, %c0_i32_0 : i32, i32, i32
  }
  func.func @transform_12(%arg0: i32) -> (i32, i32) {
    %c0_i32 = arith.constant 0 : i32
    %c0_i32_0 = arith.constant 0 : i32
    return %arg0, %c0_i32 : i32, i32
  }
}

</mosaic_0001>

<llo_original>
// kernel: tpu_custom_call.1
$region0: #{tpu_custom_call.1}
  #allocation0 [shape = 'u32[]', space=smem, size = 0x4, offset = 0x4, fixed_abs, tag = 'smem constant byte address 0x4 - core index']
  #allocation1 [shape = 'u32[144,128]{1,0:T(1,128)}', space=vmem, size = 0x12000, scoped, tag = 'internal scratch']
  %s0 = inlined_call_operand.vmem [shape: f32[256,64], index: 0, kind: input, shape index: {}]
  %s1 = inlined_call_operand.vmem [shape: f32[64,32], index: 1, kind: input, shape index: {}]
  %s2 = inlined_call_operand.vmem [shape: f32[1,32], index: 2, kind: input, shape index: {}]
  %s3 = inlined_call_operand.vmem [shape: f32[32,32], index: 3, kind: input, shape index: {}]
  %s4 = inlined_call_operand.vmem [shape: f32[1,32], index: 4, kind: input, shape index: {}]
  %s5 = inlined_call_operand.vmem [shape: f32[32,16], index: 5, kind: input, shape index: {}]
  %s6 = inlined_call_operand.vmem [shape: f32[1,16], index: 6, kind: input, shape index: {}]
  %s7 = inlined_call_operand.vmem [shape: f32[16,32], index: 7, kind: input, shape index: {}]
  %s8 = inlined_call_operand.vmem [shape: f32[1,32], index: 8, kind: input, shape index: {}]
  %s9 = inlined_call_operand.vmem [shape: f32[32,64], index: 9, kind: input, shape index: {}]
  %s10 = inlined_call_operand.vmem [shape: f32[1,64], index: 10, kind: input, shape index: {}]
  %s11 = inlined_call_operand.hbm [shape: f32[4,1,128], index: 11, kind: output, shape index: {0}]
  %s12 = inlined_call_operand.vmem [shape: f32[256,16], index: 12, kind: output, shape index: {1}]
  %13 = xla_tuple %s11, %s12
  %s14 = sld [smem:[#allocation0]]
  $region85: #{tpu_custom_call.1} parent=0
    _
  %s16 = ssub.s32 1, %s14
  %s17 = scalar_select 0, %s16, %s14
  $region1: #{tpu_custom_call.1} parent=0
    #allocation2 [shape = 'u8[1024]{0}', space=vmem, size = 0x400, scoped, tag = 'output window, operand 0']
    #allocation3 [shape = 's32[2]{0}', space=sflag, size = 0x8, scoped, tag = 'scoped memory for tpu_custom_call.1']
    %18 = vsyncpa [#allocation3], 0
    %s19 = scalar_lea.sflag [#allocation3], 1
    %20 = vsyncpa %s19, 0
    loop: start=0, step=1, limit=6
    $region2: #{tpu_custom_call.1} parent=1 // loop_pre_header
      _
    $region3: #{tpu_custom_call.1} parent=1 // loop_header
      %s22 = sphi 0, %s26
      %p23 = scmp.ge.s32.totalorder %s22, 6
      %s32 = sphi 0, %s34
      %s35 = sphi 0, %s32
      %s36 = sphi 0, %s35
      %s52 = sphi 0, %s36
      %s56 = sphi 0, %s56
      %s58 = sphi 0, %s56
      %s59 = sphi 0, %s58
      %s73 = sphi 0, %s59
      %s77 = sphi 0, %s77
      %s79 = sphi 0, %s77
      %s80 = sphi 0, %s79
      %s94 = sphi 0, %s80
      %s98 = sphi 0, %s98
      %s100 = sphi 0, %s98
      %s101 = sphi 0, %s100
      %s115 = sphi 0, %s101
      %s119 = sphi 0, %s119
      %s121 = sphi 0, %s119
      %s122 = sphi 0, %s121
      %s136 = sphi 0, %s122
      %s140 = sphi 0, %s140
      %s142 = sphi 0, %s140
      %s143 = sphi 0, %s142
      %s157 = sphi 0, %s143
      %s161 = sphi 0, %s161
      %s163 = sphi 0, %s161
      %s164 = sphi 0, %s163
      %s178 = sphi 0, %s164
      %s182 = sphi 0, %s182
      %s184 = sphi 0, %s182
      %s185 = sphi 0, %s184
      %s199 = sphi 0, %s185
      %s203 = sphi 0, %s203
      %s205 = sphi 0, %s203
      %s206 = sphi 0, %s205
      %s220 = sphi 0, %s206
      %s224 = sphi 0, %s224
      %s226 = sphi 0, %s224
      %s227 = sphi 0, %s226
      %s241 = sphi 0, %s227
      %s245 = sphi 0, %s245
      %s247 = sphi 0, %s245
      %s248 = sphi 0, %s247
      %s262 = sphi 0, %s248
      %s268 = sphi 0, %s270
      %s271 = sphi 0, %s268
      %s272 = sphi 0, %s271
      %s288 = sphi 0, %s272
      %s294 = sphi 0, %s296
      %s297 = sphi 0, %s294
      %s298 = sphi 0, %s297
      %s314 = sphi 0, %s298
    $region4: #{tpu_custom_call.1} parent=1 // loop_header_branch
      %25 = sbr.rel (%p23) target = $region8
    $region5: #{tpu_custom_call.1} parent=1 // loop_body
      %s27 = ssub.s32 %s22, 1
      %s28 = ssub.s32 %s22, 2
      %s29 = sadd.s32 %s22, 1
      %s30 = ssub.s32 %s22, %s29
      %p31 = scmp.eq.s32.totalorder %s30, 0
      %s33 = sadd.s32 %s32, 1
      %s34 = scalar_select %p31, %s32, %s33
      %p37 = pneg %p31
      %p38 = scmp.eq.s32.totalorder %s22, 3
      %p39 = por %p37, %p38
      %p40 = scmp.ne.s32.totalorder %s32, %s35
      %p41 = scmp.eq.s32.totalorder %s22, 0
      %p42 = por %p40, %p41
      %p43 = scmp.ne.s32.totalorder %s32, %s35
      %p44 = scmp.eq.s32.totalorder %s27, 3
      %p45 = por %p43, %p44
      %p46 = scmp.ne.s32.totalorder %s35, %s36
      %p47 = scmp.eq.s32.totalorder %s27, 0
      %p48 = por %p46, %p47
      %p49 = scmp.ne.s32.totalorder %s35, %s36
      %p50 = scmp.eq.s32.totalorder %s28, 3
      %p51 = por %p49, %p50
      %p53 = scmp.ne.s32.totalorder %s36, %s52
      %p54 = scmp.eq.s32.totalorder %s28, 0
      %p55 = por %p53, %p54
      %s57 = sadd.s32 %s56, 1
      %p60 = scmp.eq.s32.totalorder %s22, 3
      %p61 = scmp.ne.s32.totalorder %s56, %s58
      %p62 = scmp.eq.s32.totalorder %s22, 0
      %p63 = por %p61, %p62
      %p64 = scmp.ne.s32.totalorder %s56, %s58
      %p65 = scmp.eq.s32.totalorder %s27, 3
      %p66 = por %p64, %p65
      %p67 = scmp.ne.s32.totalorder %s58, %s59
      %p68 = scmp.eq.s32.totalorder %s27, 0
      %p69 = por %p67, %p68
      %p70 = scmp.ne.s32.totalorder %s58, %s59
      %p71 = scmp.eq.s32.totalorder %s28, 3
      %p72 = por %p70, %p71
      %p74 = scmp.ne.s32.totalorder %s59, %s73
      %p75 = scmp.eq.s32.totalorder %s28, 0
      %p76 = por %p74, %p75
      %s78 = sadd.s32 %s77, 1
      %p81 = scmp.eq.s32.totalorder %s22, 3
      %p82 = scmp.ne.s32.totalorder %s77, %s79
      %p83 = scmp.eq.s32.totalorder %s22, 0
      %p84 = por %p82, %p83
      %p85 = scmp.ne.s32.totalorder %s77, %s79
      %p86 = scmp.eq.s32.totalorder %s27, 3
      %p87 = por %p85, %p86
      %p88 = scmp.ne.s32.totalorder %s79, %s80
      %p89 = scmp.eq.s32.totalorder %s27, 0
      %p90 = por %p88, %p89
      %p91 = scmp.ne.s32.totalorder %s79, %s80
      %p92 = scmp.eq.s32.totalorder %s28, 3
      %p93 = por %p91, %p92
      %p95 = scmp.ne.s32.totalorder %s80, %s94
      %p96 = scmp.eq.s32.totalorder %s28, 0
      %p97 = por %p95, %p96
      %s99 = sadd.s32 %s98, 1
      %p102 = scmp.eq.s32.totalorder %s22, 3
      %p103 = scmp.ne.s32.totalorder %s98, %s100
      %p104 = scmp.eq.s32.totalorder %s22, 0
      %p105 = por %p103, %p104
      %p106 = scmp.ne.s32.totalorder %s98, %s100
      %p107 = scmp.eq.s32.totalorder %s27, 3
      %p108 = por %p106, %p107
      %p109 = scmp.ne.s32.totalorder %s100, %s101
      %p110 = scmp.eq.s32.totalorder %s27, 0
      %p111 = por %p109, %p110
      %p112 = scmp.ne.s32.totalorder %s100, %s101
      %p113 = scmp.eq.s32.totalorder %s28, 3
      %p114 = por %p112, %p113
      %p116 = scmp.ne.s32.totalorder %s101, %s115
      %p117 = scmp.eq.s32.totalorder %s28, 0
      %p118 = por %p116, %p117
      %s120 = sadd.s32 %s119, 1
      %p123 = scmp.eq.s32.totalorder %s22, 3
      %p124 = scmp.ne.s32.totalorder %s119, %s121
      %p125 = scmp.eq.s32.totalorder %s22, 0
      %p126 = por %p124, %p125
      %p127 = scmp.ne.s32.totalorder %s119, %s121
      %p128 = scmp.eq.s32.totalorder %s27, 3
      %p129 = por %p127, %p128
      %p130 = scmp.ne.s32.totalorder %s121, %s122
      %p131 = scmp.eq.s32.totalorder %s27, 0
      %p132 = por %p130, %p131
      %p133 = scmp.ne.s32.totalorder %s121, %s122
      %p134 = scmp.eq.s32.totalorder %s28, 3
      %p135 = por %p133, %p134
      %p137 = scmp.ne.s32.totalorder %s122, %s136
      %p138 = scmp.eq.s32.totalorder %s28, 0
      %p139 = por %p137, %p138
      %s141 = sadd.s32 %s140, 1
      %p144 = scmp.eq.s32.totalorder %s22, 3
      %p145 = scmp.ne.s32.totalorder %s140, %s142
      %p146 = scmp.eq.s32.totalorder %s22, 0
      %p147 = por %p145, %p146
      %p148 = scmp.ne.s32.totalorder %s140, %s142
      %p149 = scmp.eq.s32.totalorder %s27, 3
      %p150 = por %p148, %p149
      %p151 = scmp.ne.s32.totalorder %s142, %s143
      %p152 = scmp.eq.s32.totalorder %s27, 0
      %p153 = por %p151, %p152
      %p154 = scmp.ne.s32.totalorder %s142, %s143
      %p155 = scmp.eq.s32.totalorder %s28, 3
      %p156 = por %p154, %p155
      %p158 = scmp.ne.s32.totalorder %s143, %s157
      %p159 = scmp.eq.s32.totalorder %s28, 0
      %p160 = por %p158, %p159
      %s162 = sadd.s32 %s161, 1
      %p165 = scmp.eq.s32.totalorder %s22, 3
      %p166 = scmp.ne.s32.totalorder %s161, %s163
      %p167 = scmp.eq.s32.totalorder %s22, 0
      %p168 = por %p166, %p167
      %p169 = scmp.ne.s32.totalorder %s161, %s163
      %p170 = scmp.eq.s32.totalorder %s27, 3
      %p171 = por %p169, %p170
      %p172 = scmp.ne.s32.totalorder %s163, %s164
      %p173 = scmp.eq.s32.totalorder %s27, 0
      %p174 = por %p172, %p173
      %p175 = scmp.ne.s32.totalorder %s163, %s164
      %p176 = scmp.eq.s32.totalorder %s28, 3
      %p177 = por %p175, %p176
      %p179 = scmp.ne.s32.totalorder %s164, %s178
      %p180 = scmp.eq.s32.totalorder %s28, 0
      %p181 = por %p179, %p180
      %s183 = sadd.s32 %s182, 1
      %p186 = scmp.eq.s32.totalorder %s22, 3
      %p187 = scmp.ne.s32.totalorder %s182, %s184
      %p188 = scmp.eq.s32.totalorder %s22, 0
      %p189 = por %p187, %p188
      %p190 = scmp.ne.s32.totalorder %s182, %s184
      %p191 = scmp.eq.s32.totalorder %s27, 3
      %p192 = por %p190, %p191
      %p193 = scmp.ne.s32.totalorder %s184, %s185
      %p194 = scmp.eq.s32.totalorder %s27, 0
      %p195 = por %p193, %p194
      %p196 = scmp.ne.s32.totalorder %s184, %s185
      %p197 = scmp.eq.s32.totalorder %s28, 3
      %p198 = por %p196, %p197
      %p200 = scmp.ne.s32.totalorder %s185, %s199
      %p201 = scmp.eq.s32.totalorder %s28, 0
      %p202 = por %p200, %p201
      %s204 = sadd.s32 %s203, 1
      %p207 = scmp.eq.s32.totalorder %s22, 3
      %p208 = scmp.ne.s32.totalorder %s203, %s205
      %p209 = scmp.eq.s32.totalorder %s22, 0
      %p210 = por %p208, %p209
      %p211 = scmp.ne.s32.totalorder %s203, %s205
      %p212 = scmp.eq.s32.totalorder %s27, 3
      %p213 = por %p211, %p212
      %p214 = scmp.ne.s32.totalorder %s205, %s206
      %p215 = scmp.eq.s32.totalorder %s27, 0
      %p216 = por %p214, %p215
      %p217 = scmp.ne.s32.totalorder %s205, %s206
      %p218 = scmp.eq.s32.totalorder %s28, 3
      %p219 = por %p217, %p218
      %p221 = scmp.ne.s32.totalorder %s206, %s220
      %p222 = scmp.eq.s32.totalorder %s28, 0
      %p223 = por %p221, %p222
      %s225 = sadd.s32 %s224, 1
      %p228 = scmp.eq.s32.totalorder %s22, 3
      %p229 = scmp.ne.s32.totalorder %s224, %s226
      %p230 = scmp.eq.s32.totalorder %s22, 0
      %p231 = por %p229, %p230
      %p232 = scmp.ne.s32.totalorder %s224, %s226
      %p233 = scmp.eq.s32.totalorder %s27, 3
      %p234 = por %p232, %p233
      %p235 = scmp.ne.s32.totalorder %s226, %s227
      %p236 = scmp.eq.s32.totalorder %s27, 0
      %p237 = por %p235, %p236
      %p238 = scmp.ne.s32.totalorder %s226, %s227
      %p239 = scmp.eq.s32.totalorder %s28, 3
      %p240 = por %p238, %p239
      %p242 = scmp.ne.s32.totalorder %s227, %s241
      %p243 = scmp.eq.s32.totalorder %s28, 0
      %p244 = por %p242, %p243
      %s246 = sadd.s32 %s245, 1
      %p249 = scmp.eq.s32.totalorder %s22, 3
      %p250 = scmp.ne.s32.totalorder %s245, %s247
      %p251 = scmp.eq.s32.totalorder %s22, 0
      %p252 = por %p250, %p251
      %p253 = scmp.ne.s32.totalorder %s245, %s247
      %p254 = scmp.eq.s32.totalorder %s27, 3
      %p255 = por %p253, %p254
      %p256 = scmp.ne.s32.totalorder %s247, %s248
      %p257 = scmp.eq.s32.totalorder %s27, 0
      %p258 = por %p256, %p257
      %p259 = scmp.ne.s32.totalorder %s247, %s248
      %p260 = scmp.eq.s32.totalorder %s28, 3
      %p261 = por %p259, %p260
      %p263 = scmp.ne.s32.totalorder %s248, %s262
      %p264 = scmp.eq.s32.totalorder %s28, 0
      %p265 = por %p263, %p264
      %s266 = ssub.s32 %s22, %s29
      %p267 = scmp.eq.s32.totalorder %s266, 0
      %s269 = sadd.s32 %s268, 1
      %s270 = scalar_select %p267, %s268, %s269
      %p273 = pneg %p267
      %p274 = scmp.eq.s32.totalorder %s22, 3
      %p275 = por %p273, %p274
      %p276 = scmp.ne.s32.totalorder %s268, %s271
      %p277 = scmp.eq.s32.totalorder %s22, 0
      %p278 = por %p276, %p277
      %p279 = scmp.ne.s32.totalorder %s268, %s271
      %p280 = scmp.eq.s32.totalorder %s27, 3
      %p281 = por %p279, %p280
      %p282 = scmp.ne.s32.totalorder %s271, %s272
      %p283 = scmp.eq.s32.totalorder %s27, 0
      %p284 = por %p282, %p283
      %p285 = scmp.ne.s32.totalorder %s271, %s272
      %p286 = scmp.eq.s32.totalorder %s28, 3
      %p287 = por %p285, %p286
      %p289 = scmp.ne.s32.totalorder %s272, %s288
      %p290 = scmp.eq.s32.totalorder %s28, 0
      %p291 = por %p289, %p290
      %s292 = ssub.s32 %s22, %s29
      %p293 = scmp.eq.s32.totalorder %s292, 0
      %s295 = sadd.s32 %s294, 1
      %s296 = scalar_select %p293, %s294, %s295
      %p299 = pneg %p293
      %p300 = scmp.eq.s32.totalorder %s22, 3
      %p301 = por %p299, %p300
      %p302 = scmp.ne.s32.totalorder %s294, %s297
      %p303 = scmp.eq.s32.totalorder %s22, 0
      %p304 = por %p302, %p303
      %p305 = scmp.ne.s32.totalorder %s294, %s297
      %p306 = scmp.eq.s32.totalorder %s27, 3
      %p307 = por %p305, %p306
      %p308 = scmp.ne.s32.totalorder %s297, %s298
      %p309 = scmp.eq.s32.totalorder %s27, 0
      %p310 = por %p308, %p309
      %p311 = scmp.ne.s32.totalorder %s297, %s298
      %p312 = scmp.eq.s32.totalorder %s28, 3
      %p313 = por %p311, %p312
      %p315 = scmp.ne.s32.totalorder %s298, %s314
      %p316 = scmp.eq.s32.totalorder %s28, 0
      %p317 = por %p315, %p316
      %p318 = scmp.le.s32.totalorder 1, %s22
      %p319 = scmp.lt.s32.totalorder %s22, 5
      %p320 = pnand %p318, %p319
      %p321 = pneg %p320
      // Predicated region
      $region9: #{tpu_custom_call.1} parent=5 // pred_check
        _
      $region10: #{tpu_custom_call.1} parent=5 // pred_check_branch
        %323 = sbr.rel (%p320) target = $region12
      $region11: #{tpu_custom_call.1} parent=5 // pred_region
        %s324 = ssub.s32 %s22, 1
        // Predicated region
        $region13: #{tpu_custom_call.1} parent=11 // pred_check
          %p325 = pneg %p69
        $region14: #{tpu_custom_call.1} parent=11 // pred_check_branch
          %327 = sbr.rel (%p325) target = $region16
        $region15: #{tpu_custom_call.1} parent=11 // pred_region
          _
        $region16: #{tpu_custom_call.1} parent=11 // pred_fallthru
          _
        // Predicated region
        $region17: #{tpu_custom_call.1} parent=11 // pred_check
          %p328 = pneg %p90
        $region18: #{tpu_custom_call.1} parent=11 // pred_check_branch
          %330 = sbr.rel (%p328) target = $region20
        $region19: #{tpu_custom_call.1} parent=11 // pred_region
          _
        $region20: #{tpu_custom_call.1} parent=11 // pred_fallthru
          _
        // Predicated region
        $region21: #{tpu_custom_call.1} parent=11 // pred_check
          %p331 = pneg %p111
        $region22: #{tpu_custom_call.1} parent=11 // pred_check_branch
          %333 = sbr.rel (%p331) target = $region24
        $region23: #{tpu_custom_call.1} parent=11 // pred_region
          _
        $region24: #{tpu_custom_call.1} parent=11 // pred_fallthru
          _
        // Predicated region
        $region25: #{tpu_custom_call.1} parent=11 // pred_check
          %p334 = pneg %p132
        $region26: #{tpu_custom_call.1} parent=11 // pred_check_branch
          %336 = sbr.rel (%p334) target = $region28
        $region27: #{tpu_custom_call.1} parent=11 // pred_region
          _
        $region28: #{tpu_custom_call.1} parent=11 // pred_fallthru
          _
        // Predicated region
        $region29: #{tpu_custom_call.1} parent=11 // pred_check
          %p337 = pneg %p153
        $region30: #{tpu_custom_call.1} parent=11 // pred_check_branch
          %339 = sbr.rel (%p337) target = $region32
        $region31: #{tpu_custom_call.1} parent=11 // pred_region
          _
        $region32: #{tpu_custom_call.1} parent=11 // pred_fallthru
          _
        // Predicated region
        $region33: #{tpu_custom_call.1} parent=11 // pred_check
          %p340 = pneg %p174
        $region34: #{tpu_custom_call.1} parent=11 // pred_check_branch
          %342 = sbr.rel (%p340) target = $region36
        $region35: #{tpu_custom_call.1} parent=11 // pred_region
          _
        $region36: #{tpu_custom_call.1} parent=11 // pred_fallthru
          _
        // Predicated region
        $region37: #{tpu_custom_call.1} parent=11 // pred_check
          %p343 = pneg %p195
        $region38: #{tpu_custom_call.1} parent=11 // pred_check_branch
          %345 = sbr.rel (%p343) target = $region40
        $region39: #{tpu_custom_call.1} parent=11 // pred_region
          _
        $region40: #{tpu_custom_call.1} parent=11 // pred_fallthru
          _
        // Predicated region
        $region41: #{tpu_custom_call.1} parent=11 // pred_check
          %p346 = pneg %p216
        $region42: #{tpu_custom_call.1} parent=11 // pred_check_branch
          %348 = sbr.rel (%p346) target = $region44
        $region43: #{tpu_custom_call.1} parent=11 // pred_region
          _
        $region44: #{tpu_custom_call.1} parent=11 // pred_fallthru
          _
        // Predicated region
        $region45: #{tpu_custom_call.1} parent=11 // pred_check
          %p349 = pneg %p237
        $region46: #{tpu_custom_call.1} parent=11 // pred_check_branch
          %351 = sbr.rel (%p349) target = $region48
        $region47: #{tpu_custom_call.1} parent=11 // pred_region
          _
        $region48: #{tpu_custom_call.1} parent=11 // pred_fallthru
          _
        // Predicated region
        $region49: #{tpu_custom_call.1} parent=11 // pred_check
          %p352 = pneg %p258
        $region50: #{tpu_custom_call.1} parent=11 // pred_check_branch
          %354 = sbr.rel (%p352) target = $region52
        $region51: #{tpu_custom_call.1} parent=11 // pred_region
          _
        $region52: #{tpu_custom_call.1} parent=11 // pred_fallthru
          _
      $region12: #{tpu_custom_call.1} parent=5 // pred_fallthru
        _
      %p355 = scmp.lt.s32.totalorder %s22, 4
      // Predicated region
      $region53: #{tpu_custom_call.1} parent=5 // pred_check
        %p356 = pneg %p355
      $region54: #{tpu_custom_call.1} parent=5 // pred_check_branch
        %358 = sbr.rel (%p356) target = $region56
      $region55: #{tpu_custom_call.1} parent=5 // pred_region
        // Predicated region
        $region57: #{tpu_custom_call.1} parent=55 // pred_check
          %p359 = pneg %p42
        $region58: #{tpu_custom_call.1} parent=55 // pred_check_branch
          %361 = sbr.rel (%p359) target = $region60
        $region59: #{tpu_custom_call.1} parent=55 // pred_region
          %s362 = smul.u32 8, %s22
          %p363 = scmp.lt.s32.totalorder %s362, 31
          %s364 = scalar_select %p363, %s362, 31
          %s365 = smul.addr %s364, 8
          %s366 = scalar_lea.vmem %s0, %s365
          %s367 = smul.u32 8, %s22
        $region60: #{tpu_custom_call.1} parent=55 // pred_fallthru
          _
      $region56: #{tpu_custom_call.1} parent=5 // pred_fallthru
        _
      %p368 = scmp.le.s32.totalorder 1, %s22
      %p369 = scmp.lt.s32.totalorder %s22, 5
      %p370 = pnand %p368, %p369
      %p371 = pneg %p370
      // Predicated region
      $region61: #{tpu_custom_call.1} parent=5 // pred_check
        _
      $region62: #{tpu_custom_call.1} parent=5 // pred_check_branch
        %373 = sbr.rel (%p370) target = $region64
      $region63: #{tpu_custom_call.1} parent=5 // pred_region
        %s374 = ssub.s32 %s22, 1
        %s375 = smul.u32 8, %s27
        %p376 = scmp.lt.s32.totalorder %s375, 31
        %s377 = scalar_select %p376, %s375, 31
        %s378 = smul.addr %s377, 8
        %s379 = scalar_lea.vmem %s0, %s378
        %p380 = pneg %p48
        %p381 = pneg %p45
        %p382 = pneg %p69
        %p383 = pneg %p66
        %p384 = pneg %p90
        %p385 = pneg %p87
        %p386 = pneg %p111
        %p387 = pneg %p108
        %p388 = pneg %p132
        %p389 = pneg %p129
        %p390 = pneg %p153
        %p391 = pneg %p150
        %p392 = pneg %p174
        %p393 = pneg %p171
        %p394 = pneg %p195
        %p395 = pneg %p192
        %p396 = pneg %p216
        %p397 = pneg %p213
        %p398 = pneg %p237
        %p399 = pneg %p234
        %p400 = pneg %p258
        %p401 = pneg %p255
        %p402 = pneg %p284
        %p403 = pneg %p281
        %s404 = sand.u32 %s271, 1
        %s405 = scalar_lea.sflag [#allocation3], %s404
        %s406 = sand.u32 %s271, 1
        %s407 = scalar_lea.vmem [#allocation2], %s406
        %p408 = pneg %p310
        %p409 = pneg %p307
        %s410 = smul.u32 8, %s27
        %p411 = scmp.lt.s32.totalorder %s410, 31
        %s412 = scalar_select %p411, %s410, 31
        %s413 = smul.addr %s412, 8
        %s414 = scalar_lea.vmem %s12, %s413
        %s415 = smul.u32 8, %s27
        %p416 = scmp.lt.s32.totalorder %s415, 31
        %s417 = scalar_select %p416, %s415, 31
        %s418 = smul.addr %s417, 8
        %s419 = scalar_lea.vmem %s0, %s418
        %s420 = smul.u32 8, %s27
        %s421 = smul.u32 8, %s27
        %p422 = scmp.lt.s32.totalorder %s421, 31
        %s423 = scalar_select %p422, %s421, 31
        %s424 = smul.addr %s423, 8
        %s425 = scalar_lea.vmem %s12, %s424
        %s426 = smul.u32 8, %s27
        %v427 = vld [vmem:[%s419] sm:$0xff]
        %v428 = vld [vmem:[%s419 + $0x8] sm:$0xff]
        %v429 = vld [vmem:[%s419 + $0x10] sm:$0xff]
        %v430 = vld [vmem:[%s419 + $0x18] sm:$0xff]
        %v431 = vld [vmem:[%s419 + $0x20] sm:$0xff]
        %v432 = vld [vmem:[%s419 + $0x28] sm:$0xff]
        %v433 = vld [vmem:[%s419 + $0x30] sm:$0xff]
        %v434 = vld [vmem:[%s419 + $0x38] sm:$0xff]
        %v435 = vld [vmem:[%s1] sm:$0xff]
        %v436 = vld [vmem:[%s1 + $0x8] sm:$0xff]
        %v437 = vld [vmem:[%s1 + $0x10] sm:$0xff]
        %v438 = vld [vmem:[%s1 + $0x18] sm:$0xff]
        %v439 = vld [vmem:[%s1 + $0x20] sm:$0xff]
        %v440 = vld [vmem:[%s1 + $0x28] sm:$0xff]
        %v441 = vld [vmem:[%s1 + $0x30] sm:$0xff]
        %v442 = vld [vmem:[%s1 + $0x38] sm:$0xff]
        %v443 = vld [vmem:[%s2] sm:$0x1]
        %v445 = vlaneseq
        %v446 = vshrl.u32 %v445, 7
        %v447 = vsub.s32 0, %v446
        %v448 = vrot.slane %v443, %v447
        %vm450 = vcmask 523264
        %v452 = vsel %vm450, %v427, 0
        %v455 = vsel %vm450, %v428, 0
        %v458 = vsel %vm450, %v429, 0
        %v461 = vsel %vm450, %v430, 0
        %v464 = vsel %vm450, %v431, 0
        %v467 = vsel %vm450, %v432, 0
        %v470 = vsel %vm450, %v433, 0
        %v473 = vsel %vm450, %v434, 0
        %475 = vmatprep.subr.mxu0 0.0
        %476 = vmatpush1.msra.mxu0 %v435
        %477 = vmatprep.subr.mxu0 0.0
        %478 = vmatpush1.msra.mxu0 %v436
        %479 = vmatprep.subr.mxu0 0.0
        %480 = vmatpush1.msra.mxu0 %v437
        %481 = vmatprep.subr.mxu0 0.0
        %482 = vmatpush1.msra.mxu0 %v438
        %483 = vmatprep.subr.mxu0 0.0
        %484 = vmatpush1.msra.mxu0 %v439
        %485 = vmatprep.subr.mxu0 0.0
        %486 = vmatpush1.msra.mxu0 %v440
        %487 = vmatprep.subr.mxu0 0.0
        %488 = vmatpush1.msra.mxu0 %v441
        %489 = vmatprep.subr.mxu0 0.0
        %490 = vmatpush1.msra.mxu0 %v442
        %491 = vmatprep.subr.mxu0 0.0
        %492 = vmatpush1.msra.mxu0 0.0
        %493 = vmatprep.subr.mxu0 0.0
        %494 = vmatpush1.msra.mxu0 0.0
        %495 = vmatprep.subr.mxu0 0.0
        %496 = vmatpush1.msra.mxu0 0.0
        %497 = vmatprep.subr.mxu0 0.0
        %498 = vmatpush1.msra.mxu0 0.0
        %499 = vmatprep.subr.mxu0 0.0
        %500 = vmatpush1.msra.mxu0 0.0
        %501 = vmatprep.subr.mxu0 0.0
        %502 = vmatpush1.msra.mxu0 0.0
        %503 = vmatprep.subr.mxu0 0.0
        %504 = vmatpush1.msra.mxu0 0.0
        %505 = vmatprep.subr.mxu0 0.0
        %506 = vmatpush1.msra.mxu0 0.0
        %507 = vmatprep.subr.mxu0 0.0
        %508 = vmatpush1.msra.mxu0 0.0
        %509 = vmatprep.subr.mxu0 0.0
        %510 = vmatpush1.msra.mxu0 0.0
        %511 = vmatprep.subr.mxu0 0.0
        %512 = vmatpush1.msra.mxu0 0.0
        %513 = vmatprep.subr.mxu0 0.0
        %514 = vmatpush1.msra.mxu0 0.0
        %515 = vmatprep.subr.mxu0 0.0
        %516 = vmatpush1.msra.mxu0 0.0
        %517 = vmatprep.subr.mxu0 0.0
        %518 = vmatpush1.msra.mxu0 0.0
        %519 = vmatprep.subr.mxu0 0.0
        %520 = vmatpush1.msra.mxu0 0.0
        %521 = vmatprep.subr.mxu0 0.0
        %522 = vmatpush1.msra.mxu0 0.0
        %523 = vmatprep.subr.mxu0 0.0
        %524 = vmatpush1.msra.mxu0 0.0
        %525 = vmatprep.subr.mxu0 0.0
        %526 = vmatpush1.msra.mxu0 0.0
        %527 = vmatprep.subr.mxu0 0.0
        %528 = vmatpush1.msra.mxu0 0.0
        %529 = vmatprep.subr.mxu0 0.0
        %530 = vmatpush1.msra.mxu0 0.0
        %531 = vmatprep.subr.mxu0 0.0
        %532 = vmatpush1.msra.mxu0 0.0
        %533 = vmatprep.subr.mxu0 0.0
        %534 = vmatpush1.msra.mxu0 0.0
        %535 = vmatprep.subr.mxu0 0.0
        %536 = vmatpush1.msra.mxu0 0.0
        %537 = vmatprep.subr.mxu0 0.0
        %538 = vmatpush1.msra.mxu0 0.0
        %539 = vmatprep.mubr.f32.mxu0 0.0
        %540 = vmatmul.mubr.f32.gmra.mrb[0].mxu0 %v452
        %v541 = vpop.f32.mrb[0].mxu0
        %v542 = vadd.f32 %v448, %v541
        %v543 = vpop.f32.mrb[0].mxu0
        %544 = vmatprep.mubr.f32.mxu0 0.0
        %545 = vmatmul.mubr.f32.gmra.mrb[0].mxu0 %v455
        %v546 = vpop.f32.mrb[0].mxu0
        %v547 = vadd.f32 %v448, %v546
        %v548 = vpop.f32.mrb[0].mxu0
        %549 = vmatprep.mubr.f32.mxu0 0.0
        %550 = vmatmul.mubr.f32.gmra.mrb[0].mxu0 %v458
        %v551 = vpop.f32.mrb[0].mxu0
        %v552 = vadd.f32 %v448, %v551
        %v553 = vpop.f32.mrb[0].mxu0
        %554 = vmatprep.mubr.f32.mxu0 0.0
        %555 = vmatmul.mubr.f32.gmra.mrb[0].mxu0 %v461
        %v556 = vpop.f32.mrb[0].mxu0
        %v557 = vadd.f32 %v448, %v556
        %v558 = vpop.f32.mrb[0].mxu0
        %559 = vmatprep.mubr.f32.mxu0 0.0
        %560 = vmatmul.mubr.f32.gmra.mrb[0].mxu0 %v464
        %v561 = vpop.f32.mrb[0].mxu0
        %v562 = vadd.f32 %v448, %v561
        %v563 = vpop.f32.mrb[0].mxu0
        %564 = vmatprep.mubr.f32.mxu0 0.0
        %565 = vmatmul.mubr.f32.gmra.mrb[0].mxu0 %v467
        %v566 = vpop.f32.mrb[0].mxu0
        %v567 = vadd.f32 %v448, %v566
        %v568 = vpop.f32.mrb[0].mxu0
        %569 = vmatprep.mubr.f32.mxu0 0.0
        %570 = vmatmul.mubr.f32.gmra.mrb[0].mxu0 %v470
        %v571 = vpop.f32.mrb[0].mxu0
        %v572 = vadd.f32 %v448, %v571
        %v573 = vpop.f32.mrb[0].mxu0
        %574 = vmatprep.mubr.f32.mxu0 0.0
        %575 = vmatmul.mubr.f32.gmra.mrb[0].mxu0 %v473
        %v576 = vpop.f32.mrb[0].mxu0
        %v577 = vadd.f32 %v448, %v576
        %v578 = vpop.f32.mrb[0].mxu0
        %579 = vdwg.mxu0
        %v580 = vmax.f32 %v542, 0.0
        %v581 = vmax.f32 %v547, 0.0
        %v582 = vmax.f32 %v552, 0.0
        %v583 = vmax.f32 %v557, 0.0
        %v584 = vmax.f32 %v562, 0.0
        %v585 = vmax.f32 %v567, 0.0
        %v586 = vmax.f32 %v572, 0.0
        %v587 = vmax.f32 %v577, 0.0
        %v588 = vld [vmem:[%s3] sm:$0xff]
        %v589 = vld [vmem:[%s3 + $0x8] sm:$0xff]
        %v590 = vld [vmem:[%s3 + $0x10] sm:$0xff]
        %v591 = vld [vmem:[%s3 + $0x18] sm:$0xff]
        %v592 = vld [vmem:[%s4] sm:$0x1]
        %v594 = vlaneseq
        %v595 = vshrl.u32 %v594, 7
        %v596 = vsub.s32 0, %v595
        %v597 = vrot.slane %v592, %v596
        %vm599 = vcmask 261120
        %v601 = vsel %vm599, %v580, 0
        %v604 = vsel %vm599, %v581, 0
        %v607 = vsel %vm599, %v582, 0
        %v610 = vsel %vm599, %v583, 0
        %v613 = vsel %vm599, %v584, 0
        %v616 = vsel %vm599, %v585, 0
        %v619 = vsel %vm599, %v586, 0
        %v622 = vsel %vm599, %v587, 0
        %624 = vmatprep.subr.mxu0 0.0
        %625 = vmatpush1.msra.mxu0 %v588
        %626 = vmatprep.subr.mxu0 0.0
        %627 = vmatpush1.msra.mxu0 %v589
        %628 = vmatprep.subr.mxu0 0.0
        %629 = vmatpush1.msra.mxu0 %v590
        %630 = vmatprep.subr.mxu0 0.0
        %631 = vmatpush1.msra.mxu0 %v591
        %632 = vmatprep.subr.mxu0 0.0
        %633 = vmatpush1.msra.mxu0 0.0
        %634 = vmatprep.subr.mxu0 0.0
        %635 = vmatpush1.msra.mxu0 0.0
        %636 = vmatprep.subr.mxu0 0.0
        %637 = vmatpush1.msra.mxu0 0.0
        %638 = vmatprep.subr.mxu0 0.0
        %639 = vmatpush1.msra.mxu0 0.0
        %640 = vmatprep.subr.mxu0 0.0
        %641 = vmatpush1.msra.mxu0 0.0
        %642 = vmatprep.subr.mxu0 0.0
        %643 = vmatpush1.msra.mxu0 0.0
        %644 = vmatprep.subr.mxu0 0.0
        %645 = vmatpush1.msra.mxu0 0.0
        %646 = vmatprep.subr.mxu0 0.0
        %647 = vmatpush1.msra.mxu0 0.0
        %648 = vmatprep.subr.mxu0 0.0
        %649 = vmatpush1.msra.mxu0 0.0
        %650 = vmatprep.subr.mxu0 0.0
        %651 = vmatpush1.msra.mxu0 0.0
        %652 = vmatprep.subr.mxu0 0.0
        %653 = vmatpush1.msra.mxu0 0.0
        %654 = vmatprep.subr.mxu0 0.0
        %655 = vmatpush1.msra.mxu0 0.0
        %656 = vmatprep.subr.mxu0 0.0
        %657 = vmatpush1.msra.mxu0 0.0
        %658 = vmatprep.subr.mxu0 0.0
        %659 = vmatpush1.msra.mxu0 0.0
        %660 = vmatprep.subr.mxu0 0.0
        %661 = vmatpush1.msra.mxu0 0.0
        %662 = vmatprep.subr.mxu0 0.0
        %663 = vmatpush1.msra.mxu0 0.0
        %664 = vmatprep.subr.mxu0 0.0
        %665 = vmatpush1.msra.mxu0 0.0
        %666 = vmatprep.subr.mxu0 0.0
        %667 = vmatpush1.msra.mxu0 0.0
        %668 = vmatprep.subr.mxu0 0.0
        %669 = vmatpush1.msra.mxu0 0.0
        %670 = vmatprep.subr.mxu0 0.0
        %671 = vmatpush1.msra.mxu0 0.0
        %672 = vmatprep.subr.mxu0 0.0
        %673 = vmatpush1.msra.mxu0 0.0
        %674 = vmatprep.subr.mxu0 0.0
        %675 = vmatpush1.msra.mxu0 0.0
        %676 = vmatprep.subr.mxu0 0.0
        %677 = vmatpush1.msra.mxu0 0.0
        %678 = vmatprep.subr.mxu0 0.0
        %679 = vmatpush1.msra.mxu0 0.0
        %680 = vmatprep.subr.mxu0 0.0
        %681 = vmatpush1.msra.mxu0 0.0
        %682 = vmatprep.subr.mxu0 0.0
        %683 = vmatpush1.msra.mxu0 0.0
        %684 = vmatprep.subr.mxu0 0.0
        %685 = vmatpush1.msra.mxu0 0.0
        %686 = vmatprep.subr.mxu0 0.0
        %687 = vmatpush1.msra.mxu0 0.0
        %688 = vmatprep.mubr.f32.mxu0 0.0
        %689 = vmatmul.mubr.f32.gmra.mrb[0].mxu0 %v601
        %v690 = vpop.f32.mrb[0].mxu0
        %v691 = vadd.f32 %v597, %v690
        %v692 = vpop.f32.mrb[0].mxu0
        %693 = vmatprep.mubr.f32.mxu0 0.0
        %694 = vmatmul.mubr.f32.gmra.mrb[0].mxu0 %v604
        %v695 = vpop.f32.mrb[0].mxu0
        %v696 = vadd.f32 %v597, %v695
        %v697 = vpop.f32.mrb[0].mxu0
        %698 = vmatprep.mubr.f32.mxu0 0.0
        %699 = vmatmul.mubr.f32.gmra.mrb[0].mxu0 %v607
        %v700 = vpop.f32.mrb[0].mxu0
        %v701 = vadd.f32 %v597, %v700
        %v702 = vpop.f32.mrb[0].mxu0
        %703 = vmatprep.mubr.f32.mxu0 0.0
        %704 = vmatmul.mubr.f32.gmra.mrb[0].mxu0 %v610
        %v705 = vpop.f32.mrb[0].mxu0
        %v706 = vadd.f32 %v597, %v705
        %v707 = vpop.f32.mrb[0].mxu0
        %708 = vmatprep.mubr.f32.mxu0 0.0
        %709 = vmatmul.mubr.f32.gmra.mrb[0].mxu0 %v613
        %v710 = vpop.f32.mrb[0].mxu0
        %v711 = vadd.f32 %v597, %v710
        %v712 = vpop.f32.mrb[0].mxu0
        %713 = vmatprep.mubr.f32.mxu0 0.0
        %714 = vmatmul.mubr.f32.gmra.mrb[0].mxu0 %v616
        %v715 = vpop.f32.mrb[0].mxu0
        %v716 = vadd.f32 %v597, %v715
        %v717 = vpop.f32.mrb[0].mxu0
        %718 = vmatprep.mubr.f32.mxu0 0.0
        %719 = vmatmul.mubr.f32.gmra.mrb[0].mxu0 %v619
        %v720 = vpop.f32.mrb[0].mxu0
        %v721 = vadd.f32 %v597, %v720
        %v722 = vpop.f32.mrb[0].mxu0
        %723 = vmatprep.mubr.f32.mxu0 0.0
        %724 = vmatmul.mubr.f32.gmra.mrb[0].mxu0 %v622
        %v725 = vpop.f32.mrb[0].mxu0
        %v726 = vadd.f32 %v597, %v725
        %v727 = vpop.f32.mrb[0].mxu0
        %728 = vdwg.mxu0
        %v729 = vmax.f32 %v691, 0.0
        %v730 = vmax.f32 %v696, 0.0
        %v731 = vmax.f32 %v701, 0.0
        %v732 = vmax.f32 %v706, 0.0
        %v733 = vmax.f32 %v711, 0.0
        %v734 = vmax.f32 %v716, 0.0
        %v735 = vmax.f32 %v721, 0.0
        %v736 = vmax.f32 %v726, 0.0
        %v737 = vld [vmem:[%s5] sm:$0xff]
        %v738 = vld [vmem:[%s5 + $0x8] sm:$0xff]
        %v739 = vld [vmem:[%s5 + $0x10] sm:$0xff]
        %v740 = vld [vmem:[%s5 + $0x18] sm:$0xff]
        %v741 = vld [vmem:[%s6] sm:$0x1]
        %v743 = vlaneseq
        %v744 = vshrl.u32 %v743, 7
        %v745 = vsub.s32 0, %v744
        %v746 = vrot.slane %v741, %v745
        %v749 = vsel %vm599, %v729, 0
        %v752 = vsel %vm599, %v730, 0
        %v755 = vsel %vm599, %v731, 0
        %v758 = vsel %vm599, %v732, 0
        %v761 = vsel %vm599, %v733, 0
        %v764 = vsel %vm599, %v734, 0
        %v767 = vsel %vm599, %v735, 0
        %v770 = vsel %vm599, %v736, 0
        %772 = vmatprep.subr.mxu0 0.0
        %773 = vmatpush1.msra.mxu0 %v737
        %774 = vmatprep.subr.mxu0 0.0
        %775 = vmatpush1.msra.mxu0 %v738
        %776 = vmatprep.subr.mxu0 0.0
        %777 = vmatpush1.msra.mxu0 %v739
        %778 = vmatprep.subr.mxu0 0.0
        %779 = vmatpush1.msra.mxu0 %v740
        %780 = vmatprep.subr.mxu0 0.0
        %781 = vmatpush1.msra.mxu0 0.0
        %782 = vmatprep.subr.mxu0 0.0
        %783 = vmatpush1.msra.mxu0 0.0
        %784 = vmatprep.subr.mxu0 0.0
        %785 = vmatpush1.msra.mxu0 0.0
        %786 = vmatprep.subr.mxu0 0.0
        %787 = vmatpush1.msra.mxu0 0.0
        %788 = vmatprep.subr.mxu0 0.0
        %789 = vmatpush1.msra.mxu0 0.0
        %790 = vmatprep.subr.mxu0 0.0
        %791 = vmatpush1.msra.mxu0 0.0
        %792 = vmatprep.subr.mxu0 0.0
        %793 = vmatpush1.msra.mxu0 0.0
        %794 = vmatprep.subr.mxu0 0.0
        %795 = vmatpush1.msra.mxu0 0.0
        %796 = vmatprep.subr.mxu0 0.0
        %797 = vmatpush1.msra.mxu0 0.0
        %798 = vmatprep.subr.mxu0 0.0
        %799 = vmatpush1.msra.mxu0 0.0
        %800 = vmatprep.subr.mxu0 0.0
        %801 = vmatpush1.msra.mxu0 0.0
        %802 = vmatprep.subr.mxu0 0.0
        %803 = vmatpush1.msra.mxu0 0.0
        %804 = vmatprep.subr.mxu0 0.0
        %805 = vmatpush1.msra.mxu0 0.0
        %806 = vmatprep.subr.mxu0 0.0
        %807 = vmatpush1.msra.mxu0 0.0
        %808 = vmatprep.subr.mxu0 0.0
        %809 = vmatpush1.msra.mxu0 0.0
        %810 = vmatprep.subr.mxu0 0.0
        %811 = vmatpush1.msra.mxu0 0.0
        %812 = vmatprep.subr.mxu0 0.0
        %813 = vmatpush1.msra.mxu0 0.0
        %814 = vmatprep.subr.mxu0 0.0
        %815 = vmatpush1.msra.mxu0 0.0
        %816 = vmatprep.subr.mxu0 0.0
        %817 = vmatpush1.msra.mxu0 0.0
        %818 = vmatprep.subr.mxu0 0.0
        %819 = vmatpush1.msra.mxu0 0.0
        %820 = vmatprep.subr.mxu0 0.0
        %821 = vmatpush1.msra.mxu0 0.0
        %822 = vmatprep.subr.mxu0 0.0
        %823 = vmatpush1.msra.mxu0 0.0
        %824 = vmatprep.subr.mxu0 0.0
        %825 = vmatpush1.msra.mxu0 0.0
        %826 = vmatprep.subr.mxu0 0.0
        %827 = vmatpush1.msra.mxu0 0.0
        %828 = vmatprep.subr.mxu0 0.0
        %829 = vmatpush1.msra.mxu0 0.0
        %830 = vmatprep.subr.mxu0 0.0
        %831 = vmatpush1.msra.mxu0 0.0
        %832 = vmatprep.subr.mxu0 0.0
        %833 = vmatpush1.msra.mxu0 0.0
        %834 = vmatprep.subr.mxu0 0.0
        %835 = vmatpush1.msra.mxu0 0.0
        %836 = vmatprep.mubr.f32.mxu0 0.0
        %837 = vmatmul.mubr.f32.gmra.mrb[0].mxu0 %v749
        %v838 = vpop.f32.mrb[0].mxu0
        %v839 = vadd.f32 %v746, %v838
        %v840 = vpop.f32.mrb[0].mxu0
        %841 = vmatprep.mubr.f32.mxu0 0.0
        %842 = vmatmul.mubr.f32.gmra.mrb[0].mxu0 %v752
        %v843 = vpop.f32.mrb[0].mxu0
        %v844 = vadd.f32 %v746, %v843
        %v845 = vpop.f32.mrb[0].mxu0
        %846 = vmatprep.mubr.f32.mxu0 0.0
        %847 = vmatmul.mubr.f32.gmra.mrb[0].mxu0 %v755
        %v848 = vpop.f32.mrb[0].mxu0
        %v849 = vadd.f32 %v746, %v848
        %v850 = vpop.f32.mrb[0].mxu0
        %851 = vmatprep.mubr.f32.mxu0 0.0
        %852 = vmatmul.mubr.f32.gmra.mrb[0].mxu0 %v758
        %v853 = vpop.f32.mrb[0].mxu0
        %v854 = vadd.f32 %v746, %v853
        %v855 = vpop.f32.mrb[0].mxu0
        %856 = vmatprep.mubr.f32.mxu0 0.0
        %857 = vmatmul.mubr.f32.gmra.mrb[0].mxu0 %v761
        %v858 = vpop.f32.mrb[0].mxu0
        %v859 = vadd.f32 %v746, %v858
        %v860 = vpop.f32.mrb[0].mxu0
        %861 = vmatprep.mubr.f32.mxu0 0.0
        %862 = vmatmul.mubr.f32.gmra.mrb[0].mxu0 %v764
        %v863 = vpop.f32.mrb[0].mxu0
        %v864 = vadd.f32 %v746, %v863
        %v865 = vpop.f32.mrb[0].mxu0
        %866 = vmatprep.mubr.f32.mxu0 0.0
        %867 = vmatmul.mubr.f32.gmra.mrb[0].mxu0 %v767
        %v868 = vpop.f32.mrb[0].mxu0
        %v869 = vadd.f32 %v746, %v868
        %v870 = vpop.f32.mrb[0].mxu0
        %871 = vmatprep.mubr.f32.mxu0 0.0
        %872 = vmatmul.mubr.f32.gmra.mrb[0].mxu0 %v770
        %v873 = vpop.f32.mrb[0].mxu0
        %v874 = vadd.f32 %v746, %v873
        %v875 = vpop.f32.mrb[0].mxu0
        %876 = vdwg.mxu0
        %v877 = vtanh.pop %v839
        %v878 = vtanh.pop %v844
        %v879 = vtanh.pop %v849
        %v880 = vtanh.pop %v854
        %v881 = vtanh.pop %v859
        %v882 = vtanh.pop %v864
        %v883 = vtanh.pop %v869
        %v884 = vtanh.pop %v874
        %vm885 = vcmask 130048
        %886 = vst.msk [vmem:[%s425] sm:$0xff] %vm885, %v877
        %887 = vst.msk [vmem:[%s425 + $0x8] sm:$0xff] %vm885, %v878
        %888 = vst.msk [vmem:[%s425 + $0x10] sm:$0xff] %vm885, %v879
        %889 = vst.msk [vmem:[%s425 + $0x18] sm:$0xff] %vm885, %v880
        %890 = vst.msk [vmem:[%s425 + $0x20] sm:$0xff] %vm885, %v881
        %891 = vst.msk [vmem:[%s425 + $0x28] sm:$0xff] %vm885, %v882
        %892 = vst.msk [vmem:[%s425 + $0x30] sm:$0xff] %vm885, %v883
        %893 = vst.msk [vmem:[%s425 + $0x38] sm:$0xff] %vm885, %v884
        %v894 = vld [vmem:[%s7] sm:$0xff]
        %v895 = vld [vmem:[%s7 + $0x8] sm:$0xff]
        %v896 = vld [vmem:[%s8] sm:$0x1]
        %v898 = vlaneseq
        %v899 = vshrl.u32 %v898, 7
        %v900 = vsub.s32 0, %v899
        %v901 = vrot.slane %v896, %v900
        %v904 = vsel %vm885, %v877, 0
        %v907 = vsel %vm885, %v878, 0
        %v910 = vsel %vm885, %v879, 0
        %v913 = vsel %vm885, %v880, 0
        %v916 = vsel %vm885, %v881, 0
        %v919 = vsel %vm885, %v882, 0
        %v922 = vsel %vm885, %v883, 0
        %v925 = vsel %vm885, %v884, 0
        %927 = vmatprep.subr.mxu0 0.0
        %928 = vmatpush1.msra.mxu0 %v894
        %929 = vmatprep.subr.mxu0 0.0
        %930 = vmatpush1.msra.mxu0 %v895
        %931 = vmatprep.subr.mxu0 0.0
        %932 = vmatpush1.msra.mxu0 0.0
        %933 = vmatprep.subr.mxu0 0.0
        %934 = vmatpush1.msra.mxu0 0.0
        %935 = vmatprep.subr.mxu0 0.0
        %936 = vmatpush1.msra.mxu0 0.0
        %937 = vmatprep.subr.mxu0 0.0
        %938 = vmatpush1.msra.mxu0 0.0
        %939 = vmatprep.subr.mxu0 0.0
        %940 = vmatpush1.msra.mxu0 0.0
        %941 = vmatprep.subr.mxu0 0.0
        %942 = vmatpush1.msra.mxu0 0.0
        %943 = vmatprep.subr.mxu0 0.0
        %944 = vmatpush1.msra.mxu0 0.0
        %945 = vmatprep.subr.mxu0 0.0
        %946 = vmatpush1.msra.mxu0 0.0
        %947 = vmatprep.subr.mxu0 0.0
        %948 = vmatpush1.msra.mxu0 0.0
        %949 = vmatprep.subr.mxu0 0.0
        %950 = vmatpush1.msra.mxu0 0.0
        %951 = vmatprep.subr.mxu0 0.0
        %952 = vmatpush1.msra.mxu0 0.0
        %953 = vmatprep.subr.mxu0 0.0
        %954 = vmatpush1.msra.mxu0 0.0
        %955 = vmatprep.subr.mxu0 0.0
        %956 = vmatpush1.msra.mxu0 0.0
        %957 = vmatprep.subr.mxu0 0.0
        %958 = vmatpush1.msra.mxu0 0.0
        %959 = vmatprep.subr.mxu0 0.0
        %960 = vmatpush1.msra.mxu0 0.0
        %961 = vmatprep.subr.mxu0 0.0
        %962 = vmatpush1.msra.mxu0 0.0
        %963 = vmatprep.subr.mxu0 0.0
        %964 = vmatpush1.msra.mxu0 0.0
        %965 = vmatprep.subr.mxu0 0.0
        %966 = vmatpush1.msra.mxu0 0.0
        %967 = vmatprep.subr.mxu0 0.0
        %968 = vmatpush1.msra.mxu0 0.0
        %969 = vmatprep.subr.mxu0 0.0
        %970 = vmatpush1.msra.mxu0 0.0
        %971 = vmatprep.subr.mxu0 0.0
        %972 = vmatpush1.msra.mxu0 0.0
        %973 = vmatprep.subr.mxu0 0.0
        %974 = vmatpush1.msra.mxu0 0.0
        %975 = vmatprep.subr.mxu0 0.0
        %976 = vmatpush1.msra.mxu0 0.0
        %977 = vmatprep.subr.mxu0 0.0
        %978 = vmatpush1.msra.mxu0 0.0
        %979 = vmatprep.subr.mxu0 0.0
        %980 = vmatpush1.msra.mxu0 0.0
        %981 = vmatprep.subr.mxu0 0.0
        %982 = vmatpush1.msra.mxu0 0.0
        %983 = vmatprep.subr.mxu0 0.0
        %984 = vmatpush1.msra.mxu0 0.0
        %985 = vmatprep.subr.mxu0 0.0
        %986 = vmatpush1.msra.mxu0 0.0
        %987 = vmatprep.subr.mxu0 0.0
        %988 = vmatpush1.msra.mxu0 0.0
        %989 = vmatprep.subr.mxu0 0.0
        %990 = vmatpush1.msra.mxu0 0.0
        %991 = vmatprep.mubr.f32.mxu0 0.0
        %992 = vmatmul.mubr.f32.gmra.mrb[0].mxu0 %v904
        %v993 = vpop.f32.mrb[0].mxu0
        %v994 = vadd.f32 %v901, %v993
        %v995 = vpop.f32.mrb[0].mxu0
        %996 = vmatprep.mubr.f32.mxu0 0.0
        %997 = vmatmul.mubr.f32.gmra.mrb[0].mxu0 %v907
        %v998 = vpop.f32.mrb[0].mxu0
        %v999 = vadd.f32 %v901, %v998
        %v1000 = vpop.f32.mrb[0].mxu0
        %1001 = vmatprep.mubr.f32.mxu0 0.0
        %1002 = vmatmul.mubr.f32.gmra.mrb[0].mxu0 %v910
        %v1003 = vpop.f32.mrb[0].mxu0
        %v1004 = vadd.f32 %v901, %v1003
        %v1005 = vpop.f32.mrb[0].mxu0
        %1006 = vmatprep.mubr.f32.mxu0 0.0
        %1007 = vmatmul.mubr.f32.gmra.mrb[0].mxu0 %v913
        %v1008 = vpop.f32.mrb[0].mxu0
        %v1009 = vadd.f32 %v901, %v1008
        %v1010 = vpop.f32.mrb[0].mxu0
        %1011 = vmatprep.mubr.f32.mxu0 0.0
        %1012 = vmatmul.mubr.f32.gmra.mrb[0].mxu0 %v916
        %v1013 = vpop.f32.mrb[0].mxu0
        %v1014 = vadd.f32 %v901, %v1013
        %v1015 = vpop.f32.mrb[0].mxu0
        %1016 = vmatprep.mubr.f32.mxu0 0.0
        %1017 = vmatmul.mubr.f32.gmra.mrb[0].mxu0 %v919
        %v1018 = vpop.f32.mrb[0].mxu0
        %v1019 = vadd.f32 %v901, %v1018
        %v1020 = vpop.f32.mrb[0].mxu0
        %1021 = vmatprep.mubr.f32.mxu0 0.0
        %1022 = vmatmul.mubr.f32.gmra.mrb[0].mxu0 %v922
        %v1023 = vpop.f32.mrb[0].mxu0
        %v1024 = vadd.f32 %v901, %v1023
        %v1025 = vpop.f32.mrb[0].mxu0
        %1026 = vmatprep.mubr.f32.mxu0 0.0
        %1027 = vmatmul.mubr.f32.gmra.mrb[0].mxu0 %v925
        %v1028 = vpop.f32.mrb[0].mxu0
        %v1029 = vadd.f32 %v901, %v1028
        %v1030 = vpop.f32.mrb[0].mxu0
        %1031 = vdwg.mxu0
        %vm1032 = vcmp.gt.f32.partialorder %v994, 0.0
        %vm1033 = vcmp.gt.f32.partialorder %v999, 0.0
        %vm1034 = vcmp.gt.f32.partialorder %v1004, 0.0
        %vm1035 = vcmp.gt.f32.partialorder %v1009, 0.0
        %vm1036 = vcmp.gt.f32.partialorder %v1014, 0.0
        %vm1037 = vcmp.gt.f32.partialorder %v1019, 0.0
        %vm1038 = vcmp.gt.f32.partialorder %v1024, 0.0
        %vm1039 = vcmp.gt.f32.partialorder %v1029, 0.0
        %v1040 = vmul.f32 %v994, 0.01
        %v1041 = vmul.f32 %v999, 0.01
        %v1042 = vmul.f32 %v1004, 0.01
        %v1043 = vmul.f32 %v1009, 0.01
        %v1044 = vmul.f32 %v1014, 0.01
        %v1045 = vmul.f32 %v1019, 0.01
        %v1046 = vmul.f32 %v1024, 0.01
        %v1047 = vmul.f32 %v1029, 0.01
        %v1048 = vsel %vm1032, %v994, %v1040
        %v1049 = vsel %vm1033, %v999, %v1041
        %v1050 = vsel %vm1034, %v1004, %v1042
        %v1051 = vsel %vm1035, %v1009, %v1043
        %v1052 = vsel %vm1036, %v1014, %v1044
        %v1053 = vsel %vm1037, %v1019, %v1045
        %v1054 = vsel %vm1038, %v1024, %v1046
        %v1055 = vsel %vm1039, %v1029, %v1047
        %v1056 = vld [vmem:[%s9] sm:$0xff]
        %v1057 = vld [vmem:[%s9 + $0x8] sm:$0xff]
        %v1058 = vld [vmem:[%s9 + $0x10] sm:$0xff]
        %v1059 = vld [vmem:[%s9 + $0x18] sm:$0xff]
        %v1060 = vld [vmem:[%s10] sm:$0x1]
        %v1062 = vlaneseq
        %v1063 = vshrl.u32 %v1062, 7
        %v1064 = vsub.s32 0, %v1063
        %v1065 = vrot.slane %v1060, %v1064
        %v1068 = vsel %vm599, %v1048, 0
        %v1071 = vsel %vm599, %v1049, 0
        %v1074 = vsel %vm599, %v1050, 0
        %v1077 = vsel %vm599, %v1051, 0
        %v1080 = vsel %vm599, %v1052, 0
        %v1083 = vsel %vm599, %v1053, 0
        %v1086 = vsel %vm599, %v1054, 0
        %v1089 = vsel %vm599, %v1055, 0
        %1091 = vmatprep.subr.mxu0 0.0
        %1092 = vmatpush1.msra.mxu0 %v1056
        %1093 = vmatprep.subr.mxu0 0.0
        %1094 = vmatpush1.msra.mxu0 %v1057
        %1095 = vmatprep.subr.mxu0 0.0
        %1096 = vmatpush1.msra.mxu0 %v1058
        %1097 = vmatprep.subr.mxu0 0.0
        %1098 = vmatpush1.msra.mxu0 %v1059
        %1099 = vmatprep.subr.mxu0 0.0
        %1100 = vmatpush1.msra.mxu0 0.0
        %1101 = vmatprep.subr.mxu0 0.0
        %1102 = vmatpush1.msra.mxu0 0.0
        %1103 = vmatprep.subr.mxu0 0.0
        %1104 = vmatpush1.msra.mxu0 0.0
        %1105 = vmatprep.subr.mxu0 0.0
        %1106 = vmatpush1.msra.mxu0 0.0
        %1107 = vmatprep.subr.mxu0 0.0
        %1108 = vmatpush1.msra.mxu0 0.0
        %1109 = vmatprep.subr.mxu0 0.0
        %1110 = vmatpush1.msra.mxu0 0.0
        %1111 = vmatprep.subr.mxu0 0.0
        %1112 = vmatpush1.msra.mxu0 0.0
        %1113 = vmatprep.subr.mxu0 0.0
        %1114 = vmatpush1.msra.mxu0 0.0
        %1115 = vmatprep.subr.mxu0 0.0
        %1116 = vmatpush1.msra.mxu0 0.0
        %1117 = vmatprep.subr.mxu0 0.0
        %1118 = vmatpush1.msra.mxu0 0.0
        %1119 = vmatprep.subr.mxu0 0.0
        %1120 = vmatpush1.msra.mxu0 0.0
        %1121 = vmatprep.subr.mxu0 0.0
        %1122 = vmatpush1.msra.mxu0 0.0
        %1123 = vmatprep.subr.mxu0 0.0
        %1124 = vmatpush1.msra.mxu0 0.0
        %1125 = vmatprep.subr.mxu0 0.0
        %1126 = vmatpush1.msra.mxu0 0.0
        %1127 = vmatprep.subr.mxu0 0.0
        %1128 = vmatpush1.msra.mxu0 0.0
        %1129 = vmatprep.subr.mxu0 0.0
        %1130 = vmatpush1.msra.mxu0 0.0
        %1131 = vmatprep.subr.mxu0 0.0
        %1132 = vmatpush1.msra.mxu0 0.0
        %1133 = vmatprep.subr.mxu0 0.0
        %1134 = vmatpush1.msra.mxu0 0.0
        %1135 = vmatprep.subr.mxu0 0.0
        %1136 = vmatpush1.msra.mxu0 0.0
        %1137 = vmatprep.subr.mxu0 0.0
        %1138 = vmatpush1.msra.mxu0 0.0
        %1139 = vmatprep.subr.mxu0 0.0
        %1140 = vmatpush1.msra.mxu0 0.0
        %1141 = vmatprep.subr.mxu0 0.0
        %1142 = vmatpush1.msra.mxu0 0.0
        %1143 = vmatprep.subr.mxu0 0.0
        %1144 = vmatpush1.msra.mxu0 0.0
        %1145 = vmatprep.subr.mxu0 0.0
        %1146 = vmatpush1.msra.mxu0 0.0
        %1147 = vmatprep.subr.mxu0 0.0
        %1148 = vmatpush1.msra.mxu0 0.0
        %1149 = vmatprep.subr.mxu0 0.0
        %1150 = vmatpush1.msra.mxu0 0.0
        %1151 = vmatprep.subr.mxu0 0.0
        %1152 = vmatpush1.msra.mxu0 0.0
        %1153 = vmatprep.subr.mxu0 0.0
        %1154 = vmatpush1.msra.mxu0 0.0
        %1155 = vmatprep.mubr.f32.mxu0 0.0
        %1156 = vmatmul.mubr.f32.gmra.mrb[0].mxu0 %v1068
        %v1157 = vpop.f32.mrb[0].mxu0
        %v1158 = vadd.f32 %v1065, %v1157
        %v1159 = vpop.f32.mrb[0].mxu0
        %1160 = vmatprep.mubr.f32.mxu0 0.0
        %1161 = vmatmul.mubr.f32.gmra.mrb[0].mxu0 %v1071
        %v1162 = vpop.f32.mrb[0].mxu0
        %v1163 = vadd.f32 %v1065, %v1162
        %v1164 = vpop.f32.mrb[0].mxu0
        %1165 = vmatprep.mubr.f32.mxu0 0.0
        %1166 = vmatmul.mubr.f32.gmra.mrb[0].mxu0 %v1074
        %v1167 = vpop.f32.mrb[0].mxu0
        %v1168 = vadd.f32 %v1065, %v1167
        %v1169 = vpop.f32.mrb[0].mxu0
        %1170 = vmatprep.mubr.f32.mxu0 0.0
        %1171 = vmatmul.mubr.f32.gmra.mrb[0].mxu0 %v1077
        %v1172 = vpop.f32.mrb[0].mxu0
        %v1173 = vadd.f32 %v1065, %v1172
        %v1174 = vpop.f32.mrb[0].mxu0
        %1175 = vmatprep.mubr.f32.mxu0 0.0
        %1176 = vmatmul.mubr.f32.gmra.mrb[0].mxu0 %v1080
        %v1177 = vpop.f32.mrb[0].mxu0
        %v1178 = vadd.f32 %v1065, %v1177
        %v1179 = vpop.f32.mrb[0].mxu0
        %1180 = vmatprep.mubr.f32.mxu0 0.0
        %1181 = vmatmul.mubr.f32.gmra.mrb[0].mxu0 %v1083
        %v1182 = vpop.f32.mrb[0].mxu0
        %v1183 = vadd.f32 %v1065, %v1182
        %v1184 = vpop.f32.mrb[0].mxu0
        %1185 = vmatprep.mubr.f32.mxu0 0.0
        %1186 = vmatmul.mubr.f32.gmra.mrb[0].mxu0 %v1086
        %v1187 = vpop.f32.mrb[0].mxu0
        %v1188 = vadd.f32 %v1065, %v1187
        %v1189 = vpop.f32.mrb[0].mxu0
        %1190 = vmatprep.mubr.f32.mxu0 0.0
        %1191 = vmatmul.mubr.f32.gmra.mrb[0].mxu0 %v1089
        %v1192 = vpop.f32.mrb[0].mxu0
        %v1193 = vadd.f32 %v1065, %v1192
        %v1194 = vpop.f32.mrb[0].mxu0
        %1195 = vdwg.mxu0
        %v1196 = vmax.f32 %v1158, 0.0
        %v1197 = vmax.f32 %v1163, 0.0
        %v1198 = vmax.f32 %v1168, 0.0
        %v1199 = vmax.f32 %v1173, 0.0
        %v1200 = vmax.f32 %v1178, 0.0
        %v1201 = vmax.f32 %v1183, 0.0
        %v1202 = vmax.f32 %v1188, 0.0
        %v1203 = vmax.f32 %v1193, 0.0
        %s1204 = smul.u32 %s27, 64
        %v1205 = vlaneseq
        %v1206 = vshrl.u32 %v1205, 7
        %v1207 = vadd.s32 %v1206, 8
        %v1208 = vadd.s32 %v1206, 16
        %v1209 = vadd.s32 %v1206, 24
        %v1210 = vadd.s32 %v1206, 32
        %v1211 = vadd.s32 %v1206, 40
        %v1212 = vadd.s32 %v1206, 48
        %v1213 = vadd.s32 %v1206, 56
        %v1214 = vstv %s1204
        %v1215 = vadd.s32 %v1214, %v1206
        %v1216 = vadd.s32 %v1214, %v1207
        %v1217 = vadd.s32 %v1214, %v1208
        %v1218 = vadd.s32 %v1214, %v1209
        %v1219 = vadd.s32 %v1214, %v1210
        %v1220 = vadd.s32 %v1214, %v1211
        %v1221 = vadd.s32 %v1214, %v1212
        %v1222 = vadd.s32 %v1214, %v1213
        %vm1223 = vcmp.lt.s32.totalorder %v1215, 200
        %vm1224 = vcmp.lt.s32.totalorder %v1216, 200
        %vm1225 = vcmp.lt.s32.totalorder %v1217, 200
        %vm1226 = vcmp.lt.s32.totalorder %v1218, 200
        %vm1227 = vcmp.lt.s32.totalorder %v1219, 200
        %vm1228 = vcmp.lt.s32.totalorder %v1220, 200
        %vm1229 = vcmp.lt.s32.totalorder %v1221, 200
        %vm1230 = vcmp.lt.s32.totalorder %v1222, 200
        %v1231 = vsub.f32 %v427, %v1196
        %v1232 = vsub.f32 %v428, %v1197
        %v1233 = vsub.f32 %v429, %v1198
        %v1234 = vsub.f32 %v430, %v1199
        %v1235 = vsub.f32 %v431, %v1200
        %v1236 = vsub.f32 %v432, %v1201
        %v1237 = vsub.f32 %v433, %v1202
        %v1238 = vsub.f32 %v434, %v1203
        %v1239 = vsel %vm1223, 1, 0
        %v1240 = vsel %vm1224, 1, 0
        %v1241 = vsel %vm1225, 1, 0
        %v1242 = vsel %vm1226, 1, 0
        %v1243 = vsel %vm1227, 1, 0
        %v1244 = vsel %vm1228, 1, 0
        %v1245 = vsel %vm1229, 1, 0
        %v1246 = vsel %vm1230, 1, 0
        %vm1247 = vcmp.eq.s32.totalorder %v1239, 1
        %vm1248 = vcmp.eq.s32.totalorder %v1240, 1
        %vm1249 = vcmp.eq.s32.totalorder %v1241, 1
        %vm1250 = vcmp.eq.s32.totalorder %v1242, 1
        %vm1251 = vcmp.eq.s32.totalorder %v1243, 1
        %vm1252 = vcmp.eq.s32.totalorder %v1244, 1
        %vm1253 = vcmp.eq.s32.totalorder %v1245, 1
        %vm1254 = vcmp.eq.s32.totalorder %v1246, 1
        %v1255 = vsel %vm1247, %v1231, 0.0
        %v1256 = vsel %vm1248, %v1232, 0.0
        %v1257 = vsel %vm1249, %v1233, 0.0
        %v1258 = vsel %vm1250, %v1234, 0.0
        %v1259 = vsel %vm1251, %v1235, 0.0
        %v1260 = vsel %vm1252, %v1236, 0.0
        %v1261 = vsel %vm1253, %v1237, 0.0
        %v1262 = vsel %vm1254, %v1238, 0.0
        %v1263 = vmul.f32 %v1255, %v1255
        %v1264 = vmul.f32 %v1256, %v1256
        %v1265 = vmul.f32 %v1257, %v1257
        %v1266 = vmul.f32 %v1258, %v1258
        %v1267 = vmul.f32 %v1259, %v1259
        %v1268 = vmul.f32 %v1260, %v1260
        %v1269 = vmul.f32 %v1261, %v1261
        %v1270 = vmul.f32 %v1262, %v1262
        %v1271 = vsel %vm450, %v1263, 0.0
        %v1272 = vsel %vm450, %v1264, 0.0
        %v1273 = vadd.f32 %v1271, %v1272
        %v1274 = vsel %vm450, %v1265, 0.0
        %v1275 = vadd.f32 %v1273, %v1274
        %v1276 = vsel %vm450, %v1266, 0.0
        %v1277 = vadd.f32 %v1275, %v1276
        %v1278 = vsel %vm450, %v1267, 0.0
        %v1279 = vadd.f32 %v1277, %v1278
        %v1280 = vsel %vm450, %v1268, 0.0
        %v1281 = vadd.f32 %v1279, %v1280
        %v1282 = vsel %vm450, %v1269, 0.0
        %v1283 = vadd.f32 %v1281, %v1282
        %v1284 = vsel %vm450, %v1270, 0.0
        %v1285 = vadd.f32 %v1283, %v1284
        %1286 = vadd.xlane.f32.xlu0 %v1285
        %v1287 = vpop.xlane.xlu0 %1286
        %v1288 = vrot.slane %v1287, 4
        %v1289 = vadd.f32 %v1287, %v1288
        %v1290 = vrot.slane %v1289, 2
        %v1291 = vadd.f32 %v1289, %v1290
        %v1292 = vrot.slane %v1291, 1
        %v1293 = vadd.f32 %v1291, %v1292
        %s1294 = vtos %v1293
        %v1295 = vstv %s1294
        %1296 = vst [vmem:[%s407] sm:$0x1] %v1295
        %s1297 = sand.u32 %s271, 1
        %s1298 = scalar_lea.sflag [#allocation3], %s1297
        %s1299 = sand.u32 %s271, 1
        %s1300 = scalar_lea.vmem [#allocation2], %s1299
        %s1301 = smul.u32 8, %s27
        %p1302 = scmp.lt.s32.totalorder %s1301, 31
        %s1303 = scalar_select %p1302, %s1301, 31
        %s1304 = smul.addr %s1303, 8
        %s1305 = scalar_lea.vmem %s12, %s1304
        // Predicated region
        $region65: #{tpu_custom_call.1} parent=63 // pred_check
          %p1306 = pneg %p281
        $region66: #{tpu_custom_call.1} parent=63 // pred_check_branch
          %1308 = sbr.rel (%p1306) target = $region68
        $region67: #{tpu_custom_call.1} parent=63 // pred_region
          %s1310 = ssub.s32 16, 16
          %1311 = vsyncadd %s1298, %s1310
          %s1312 = smul.addr %s27, 16
          %s1313 = scalar_lea.hbm %s11, %s1312
          %s1315 = sshll.u32 %s1300, 4
          %s1316 = int_to_ptr.vmem [resolvable:$true] %s1315
          %1318 = dma.vmem_to_hbm [thread:$0]  %s1316, 16, %s1313, %s1298
        $region68: #{tpu_custom_call.1} parent=63 // pred_fallthru
          _
        // Predicated region
        $region69: #{tpu_custom_call.1} parent=63 // pred_check
          %p1319 = pneg %p307
        $region70: #{tpu_custom_call.1} parent=63 // pred_check_branch
          %1321 = sbr.rel (%p1319) target = $region72
        $region71: #{tpu_custom_call.1} parent=63 // pred_region
          %s1322 = smul.u32 8, %s27
        $region72: #{tpu_custom_call.1} parent=63 // pred_fallthru
          _
      $region64: #{tpu_custom_call.1} parent=5 // pred_fallthru
        _
      %p1323 = scmp.le.s32.totalorder 2, %s22
      // Predicated region
      $region73: #{tpu_custom_call.1} parent=5 // pred_check
        %p1324 = pneg %p1323
      $region74: #{tpu_custom_call.1} parent=5 // pred_check_branch
        %1326 = sbr.rel (%p1324) target = $region76
      $region75: #{tpu_custom_call.1} parent=5 // pred_region
        %s1327 = ssub.s32 %s22, 2
        // Predicated region
        $region77: #{tpu_custom_call.1} parent=75 // pred_check
          %p1328 = pneg %p287
        $region78: #{tpu_custom_call.1} parent=75 // pred_check_branch
          %1330 = sbr.rel (%p1328) target = $region80
        $region79: #{tpu_custom_call.1} parent=75 // pred_region
          %s1331 = sand.u32 %s272, 1
          %s1332 = scalar_lea.sflag [#allocation3], %s1331
          %s1333 = sand.u32 %s272, 1
          %s1334 = scalar_lea.vmem [#allocation2], %s1333
          %1335 = dma.done %s1332, 16
        $region80: #{tpu_custom_call.1} parent=75 // pred_fallthru
          _
        // Predicated region
        $region81: #{tpu_custom_call.1} parent=75 // pred_check
          %p1336 = pneg %p313
        $region82: #{tpu_custom_call.1} parent=75 // pred_check_branch
          %1338 = sbr.rel (%p1336) target = $region84
        $region83: #{tpu_custom_call.1} parent=75 // pred_region
          %s1339 = smul.u32 8, %s28
          %p1340 = scmp.lt.s32.totalorder %s1339, 31
          %s1341 = scalar_select %p1340, %s1339, 31
          %s1342 = smul.addr %s1341, 8
          %s1343 = scalar_lea.vmem %s12, %s1342
        $region84: #{tpu_custom_call.1} parent=75 // pred_fallthru
          _
      $region76: #{tpu_custom_call.1} parent=5 // pred_fallthru
        _
    $region6: #{tpu_custom_call.1} parent=1 // loop_footer
      %s26 = sadd.s32 1, %s22
    $region7: #{tpu_custom_call.1} parent=1 // loop_footer_branch
      %21 = sbr.rel target = $region3
    $region8: #{tpu_custom_call.1} parent=1 // loop_exit
      _
    %1344 = vsyncpa [#allocation3], 1
    %s1345 = scalar_lea.sflag [#allocation3], 1
    %1346 = vsyncpa %s1345, 1

</llo_original>
